<compile_context>
chip_gen: v6e
topology: v6e:2x2x1
jax: 0.10.0
libtpu: 0.0.40
codegen_flags: <defaults>
</compile_context>

<pallas_src>
import functools
import math

import jax
import jax.numpy as jnp
from jax.experimental import pallas as pl
from jax.experimental.pallas import tpu as pltpu

LANE = 128


def _rup(x, m):
    return ((x + m - 1) // m) * m


def _pad2(a, rows, cols):
    return jnp.pad(a, ((0, rows - a.shape[0]), (0, cols - a.shape[1])))


def _nbytes(shape, dtype):
    return math.prod(shape) * jnp.dtype(dtype).itemsize


def _vmem_limit_bytes(blocks, scratch_bytes=0):
    # 2 buffers per pipelined block + persistent scratch, 2x headroom, clamped
    # to a range that is safe on v5e/v6e (128 MiB) and v7x (64 MiB) alike.
    est = scratch_bytes + sum(2 * _nbytes(s, d) for s, d in blocks)
    return int(min(max(2 * est + (2 << 20), 32 << 20), 64 << 20))


# ----------------------------------------------------------------------------
# Kernel A: streamed encoder reduction over V + all small heads.
# ----------------------------------------------------------------------------
def _encoder_head_kernel(
    # inputs
    bow_ref, gu_ref, eps_ref,
    enc_w_ref, enc_b_ref,                  # [TVK, 3Hp+Dp] bf16, [1, 3Hp+Dp] f32
    xe_lw_ref, xe_lb_ref,                  # [Hp, Dp], [1, Dp]
    ce_lw_ref, ce_lb_ref,                  # [Hp, Hp], [1, Hp]
    q_w_ref, q_b_ref,                      # [Hp, 2Kp], [1, 2Kp]
    d_w_ref, d_b_ref,                      # [Dp, 2Dp], [1, 2Dp]
    z_w_ref, z_b_ref,                      # [Kp, 2Kp], [1, 2Kp]
    # outputs
    slab_ref,                              # [TB, S_slab] f32 (lane-dense)
    lhs_ref,                               # [TB, 2(D+K)] f32
    # scratch
    enc_acc,                               # [TB, 3Hp+Dp] f32
    *, D, K, d_size,
):
    f32 = jnp.float32
    Hp = xe_lw_ref.shape[0]
    Dp = xe_lw_ref.shape[1]
    Kp = q_w_ref.shape[1] // 2
    TB = bow_ref.shape[0]
    Sp_ids = _rup(d_size, LANE)

    vk = pl.program_id(1)

    @pl.when(vk == 0)
    def _():
        enc_acc[...] = jnp.zeros_like(enc_acc)

    # Streamed V-reduction of the fused encoder matmul (bf16 MXU, f32 accumulate).
    enc_acc[...] += jnp.dot(bow_ref[...].astype(jnp.bfloat16), enc_w_ref[...],
                            preferred_element_type=f32)

    @pl.when(vk == pl.num_programs(1) - 1)
    def _():
        enc = enc_acc[...] + enc_b_ref[...]
        # All slice offsets are multiples of 128 (segments are lane-padded).
        h_x = jnp.tanh(enc[:, :Hp])                       # x_encoder hidden
        x_es = enc[:, Hp:Hp + Dp]                         # x_encoder shortcut (+bias)
        h_c = jnp.tanh(enc[:, Hp + Dp:2 * Hp + Dp])       # ctx_encoder hidden
        c_es = enc[:, 2 * Hp + Dp:]                       # ctx_encoder shortcut (+bias)

        # ----- qdx_forward: qd_logits (padded lanes are exactly zero) -----
        qd = (jnp.dot(h_x, xe_lw_ref[...], preferred_element_type=f32)
              + xe_lb_ref[...] + x_es)                    # [TB, Dp]

        # Gumbel-softmax (temperature 1.0) over the real D lanes only.
        eps_g = 1e-20
        u = gu_ref[...]                                   # [d_size, TB, Dp]
        g = -jnp.log(-jnp.log(u + eps_g) + eps_g)
        lane3 = jax.lax.broadcasted_iota(jnp.int32, (d_size, TB, Dp), 2)
        y = jnp.where(lane3 < D, qd[None, :, :] + g, -1e30)
        maxv = jnp.max(y, axis=-1, keepdims=True)

        # d_ids directly in [TB, d_size] orientation (first-max index == argmax),
        # taken from the pre-softmax values (softmax-invariant).
        lane2 = jax.lax.broadcasted_iota(jnp.int32, (TB, Dp), 1)
        ids_cols = []
        for s in range(d_size):                           # d_size is small & static
            ids_s = jnp.min(jnp.where(y[s] >= maxv[s], lane2, Dp),
                            axis=-1, keepdims=True)       # [TB, 1]
            ids_cols.append(ids_s)
        ids = jnp.concatenate(ids_cols, axis=1).astype(f32)   # exact small ints
        if Sp_ids > d_size:
            ids = jnp.concatenate(
                [ids, jnp.zeros((TB, Sp_ids - d_size), f32)], axis=1)

        e = jnp.exp(y - maxv)
        denom = jnp.sum(e, axis=-1, keepdims=True)
        soft = e * pl.reciprocal(denom, approx=True)      # EUP divide (free slot)
        sample_d = jnp.mean(soft, axis=0)                 # [TB, Dp]

        # ----- qzc_forward: ctx head, fused q_z_mu | q_z_logvar -----
        ctx = jnp.tanh(jnp.dot(h_c, ce_lw_ref[...], preferred_element_type=f32)
                       + ce_lb_ref[...] + c_es)
        q = jnp.dot(ctx, q_w_ref[...], preferred_element_type=f32) + q_b_ref[...]
        z_mu, z_logvar = q[:, :Kp], q[:, Kp:]
        sample_z = eps_ref[...] * jnp.exp(0.5 * z_logvar) + z_mu   # [TB, Kp]

        # ----- fused x_generator | x_dec_connector and ctx_generator | ctx_dec_connector
        dd = jnp.dot(sample_d, d_w_ref[...], preferred_element_type=f32) + d_b_ref[...]
        gen_d, gd = dd[:, :Dp], dd[:, Dp:]
        zz = jnp.dot(sample_z, z_w_ref[...], preferred_element_type=f32) + z_b_ref[...]
        gen_c, gc = zz[:, :Kp], zz[:, Kp:]

        # Single lane-dense slab store (every segment is 128-lane aligned).
        slab_ref[...] = jnp.concatenate(
            [qd, sample_d, gen_d, z_mu, z_logvar, sample_z, gen_c, ids], axis=1)

        # Compact LHS for the vocab-wide kernel: [gd | gc | gen_d | gen_c].
        lhs_ref[...] = jnp.concatenate(
            [gd[:, :D], gc[:, :K], gen_d[:, :D], gen_c[:, :K]], axis=1)


# ----------------------------------------------------------------------------
# Kernel B: the three vocab-wide heads, tiled over output columns.
# ----------------------------------------------------------------------------
def _vocab_head_kernel(lhs_ref, xd_w_ref, cd_w_ref, cd_b_ref, dec_w_ref,
                       x_out_ref, c_out_ref, dec_out_ref, *, D, K):
    f32 = jnp.float32
    bf16 = jnp.bfloat16
    lhs = lhs_ref[...]
    gd_gc = lhs[:, :D + K].astype(bf16)                   # decoder LHS (one matmul)
    gen_d = lhs[:, D + K:2 * D + K].astype(bf16)
    gen_c = lhs[:, 2 * D + K:].astype(bf16)
    x_out_ref[...] = jnp.dot(gen_d, xd_w_ref[...], preferred_element_type=f32)
    c_out_ref[...] = (jnp.dot(gen_c, cd_w_ref[...], preferred_element_type=f32)
                      + cd_b_ref[...])
    dec_out_ref[...] = jnp.dot(gd_gc, dec_w_ref[...], preferred_element_type=f32)


# ----------------------------------------------------------------------------
# Parameter init (PyTorch-style uniform +-1/sqrt(fan_in)), f32 master copies.
# ----------------------------------------------------------------------------
def init_params(key, V, H, D, K):
    keys = iter(jax.random.split(key, 64))

    def w(fan_in, fan_out):
        b = 1.0 / (fan_in ** 0.5)
        return jax.random.uniform(next(keys), (fan_in, fan_out), jnp.float32, -b, b)

    def bias(fan_in, fan_out):
        b = 1.0 / (fan_in ** 0.5)
        return jax.random.uniform(next(keys), (1, fan_out), jnp.float32, -b, b)

    p = {}
    p["xe_fc_w"], p["xe_fc_b"] = w(V, H), bias(V, H)          # x_encoder fc
    p["xe_last_w"], p["xe_last_b"] = w(H, D), bias(H, D)      # x_encoder last
    p["xe_es_w"], p["xe_es_b"] = w(V, D), bias(V, D)          # x_encoder shortcut
    p["xg_w"], p["xg_b"] = w(D, D), bias(D, D)                # x_generator
    p["xd_w"] = w(D, V)                                       # x_decoder (no bias)
    p["ce_fc_w"], p["ce_fc_b"] = w(V, H), bias(V, H)          # ctx_encoder fc
    p["ce_last_w"], p["ce_last_b"] = w(H, H), bias(H, H)      # ctx_encoder last
    p["ce_es_w"], p["ce_es_b"] = w(V, H), bias(V, H)          # ctx_encoder shortcut
    p["qmu_w"], p["qmu_b"] = w(H, K), bias(H, K)              # q_z_mu
    p["qlv_w"], p["qlv_b"] = w(H, K), bias(H, K)              # q_z_logvar
    p["cg_w"], p["cg_b"] = w(K, K), bias(K, K)                # ctx_generator
    p["xdc_w"], p["xdc_b"] = w(D, D), bias(D, D)              # x_dec_connector
    p["cdc_w"], p["cdc_b"] = w(K, K), bias(K, K)              # ctx_dec_connector
    p["cd_w"], p["cd_b"] = w(K, V), bias(K, V)                # ctx_decoder
    p["dec_w"] = w(D + K, V)                                  # decoder (no bias)
    return p


# ----------------------------------------------------------------------------
# One-time weight fusion / lane-padding / bf16 casts (hoisted out of forward).
# ----------------------------------------------------------------------------
def prepare_fused_params(p):
    V, H = p["xe_fc_w"].shape
    D = p["xe_last_w"].shape[1]
    K = p["qmu_w"].shape[1]
    Hp, Dp, Kp = _rup(H, LANE), _rup(D, LANE), _rup(K, LANE)
    bf16 = jnp.bfloat16

    def padc(a, cols):  # pad columns only
        return jnp.pad(a, ((0, 0), (0, cols - a.shape[1])))

    enc_w = jnp.concatenate(
        [padc(p["xe_fc_w"], Hp), padc(p["xe_es_w"], Dp),
         padc(p["ce_fc_w"], Hp), padc(p["ce_es_w"], Hp)], axis=1).astype(bf16)
    enc_b = jnp.concatenate(
        [padc(p["xe_fc_b"], Hp), padc(p["xe_es_b"], Dp),
         padc(p["ce_fc_b"], Hp), padc(p["ce_es_b"], Hp)], axis=1)

    fused = dict(
        enc_w=enc_w, enc_b=enc_b,
        xe_last_w=_pad2(p["xe_last_w"], Hp, Dp), xe_last_b=_pad2(p["xe_last_b"], 1, Dp),
        ce_last_w=_pad2(p["ce_last_w"], Hp, Hp), ce_last_b=_pad2(p["ce_last_b"], 1, Hp),
        q_w=jnp.concatenate([_pad2(p["qmu_w"], Hp, Kp), _pad2(p["qlv_w"], Hp, Kp)], axis=1),
        q_b=jnp.concatenate([_pad2(p["qmu_b"], 1, Kp), _pad2(p["qlv_b"], 1, Kp)], axis=1),
        d_w=jnp.concatenate([_pad2(p["xg_w"], Dp, Dp), _pad2(p["xdc_w"], Dp, Dp)], axis=1),
        d_b=jnp.concatenate([_pad2(p["xg_b"], 1, Dp), _pad2(p["xdc_b"], 1, Dp)], axis=1),
        z_w=jnp.concatenate([_pad2(p["cg_w"], Kp, Kp), _pad2(p["cdc_w"], Kp, Kp)], axis=1),
        z_b=jnp.concatenate([_pad2(p["cg_b"], 1, Kp), _pad2(p["cdc_b"], 1, Kp)], axis=1),
        xd_w=p["xd_w"].astype(bf16),
        cd_w=p["cd_w"].astype(bf16), cd_b=p["cd_b"],
        dec_w=p["dec_w"].astype(bf16),                      # single [D+K, V] weight
    )
    dims = dict(V=V, H=H, D=D, K=K, Hp=Hp, Dp=Dp, Kp=Kp)
    return fused, dims


# ----------------------------------------------------------------------------
# Wrapper: two pallas_calls (encoder reduction over V, vocab-wide output tiles).
# ----------------------------------------------------------------------------
def topic_discourse_forward(bow, gumbel_u, eps_z, fused, dims,
                            vk_tile=None, vout_tile=None):
    f32 = jnp.float32
    bf16 = jnp.bfloat16
    B, V = bow.shape
    d_size = gumbel_u.shape[0]
    D, K, Hp, Dp, Kp = dims["D"], dims["K"], dims["Hp"], dims["Dp"], dims["Kp"]
    S_enc = 3 * Hp + Dp
    Sp_ids = _rup(d_size, LANE)
    S_slab = 3 * Dp + 4 * Kp + Sp_ids
    L = 2 * (D + K)

    # Pad the pre-drawn randoms to the lane-aligned working widths (tiny tensors).
    gu_p = jnp.pad(gumbel_u, ((0, 0), (0, 0), (0, Dp - D)), constant_values=0.5)
    eps_p = jnp.pad(eps_z, ((0, 0), (0, Kp - K)))

    # --- batch tiling: >=2 grid steps when possible (keeps both v7x TCs busy) ---
    if B <= 8:
        TB = B
    else:
        TB = min(128, _rup(pl.cdiv(B, 2), 8))
    n_b = pl.cdiv(B, TB)

    # --- V-contraction tiling for the encoder (must divide V exactly: it is a
    #     reduction axis, so out-of-bounds block padding would pollute the acc) ---
    if vk_tile is not None and V % vk_tile == 0 and (vk_tile % LANE == 0 or vk_tile == V):
        TVK = vk_tile
    else:
        TVK = V
        for cand in (2048, 1024, 512, 256, 128):
            if V % cand == 0:
                TVK = cand
                break
    n_vk = V // TVK

    # --- V-output tiling for the vocab-wide heads (padding harmless: cropped) ---
    if vout_tile is not None and (vout_tile % LANE == 0 or vout_tile == V):
        TV = vout_tile
    else:
        TV = V if V <= 2048 else 2048
    n_v = pl.cdiv(V, TV)

    # ------------------------- kernel A: encoder + heads -------------------------
    kA = functools.partial(_encoder_head_kernel, D=D, K=K, d_size=d_size)

    a_in_specs = [
        pl.BlockSpec((TB, TVK), lambda b, v: (b, v)),            # bow
        pl.BlockSpec((d_size, TB, Dp), lambda b, v: (0, b, 0)),  # gumbel uniforms
        pl.BlockSpec((TB, Kp), lambda b, v: (b, 0)),             # reparam eps
        pl.BlockSpec((TVK, S_enc), lambda b, v: (v, 0)),         # fused encoder W
        pl.BlockSpec((1, S_enc), lambda b, v: (0, 0)),
        pl.BlockSpec((Hp, Dp), lambda b, v: (0, 0)),
        pl.BlockSpec((1, Dp), lambda b, v: (0, 0)),
        pl.BlockSpec((Hp, Hp), lambda b, v: (0, 0)),
        pl.BlockSpec((1, Hp), lambda b, v: (0, 0)),
        pl.BlockSpec((Hp, 2 * Kp), lambda b, v: (0, 0)),
        pl.BlockSpec((1, 2 * Kp), lambda b, v: (0, 0)),
        pl.BlockSpec((Dp, 2 * Dp), lambda b, v: (0, 0)),
        pl.BlockSpec((1, 2 * Dp), lambda b, v: (0, 0)),
        pl.BlockSpec((Kp, 2 * Kp), lambda b, v: (0, 0)),
        pl.BlockSpec((1, 2 * Kp), lambda b, v: (0, 0)),
    ]
    a_out_specs = (
        pl.BlockSpec((TB, S_slab), lambda b, v: (b, 0)),
        pl.BlockSpec((TB, L), lambda b, v: (b, 0)),
    )
    a_out_shapes = (
        jax.ShapeDtypeStruct((B, S_slab), f32),
        jax.ShapeDtypeStruct((B, L), f32),
    )
    a_blocks = [((TB, TVK), f32), ((d_size, TB, Dp), f32), ((TB, Kp), f32),
                ((TVK, S_enc), bf16), ((1, S_enc), f32),
                ((Hp, Dp), f32), ((1, Dp), f32), ((Hp, Hp), f32), ((1, Hp), f32),
                ((Hp, 2 * Kp), f32), ((1, 2 * Kp), f32),
                ((Dp, 2 * Dp), f32), ((1, 2 * Dp), f32),
                ((Kp, 2 * Kp), f32), ((1, 2 * Kp), f32),
                ((TB, S_slab), f32), ((TB, L), f32)]
    a_vmem = _vmem_limit_bytes(a_blocks, scratch_bytes=_nbytes((TB, S_enc), f32))

    slab, lhs = pl.pallas_call(
        kA,
        grid=(n_b, n_vk),
        in_specs=a_in_specs,
        out_specs=a_out_specs,
        out_shape=a_out_shapes,
        scratch_shapes=[pltpu.VMEM((TB, S_enc), f32)],
        compiler_params=pltpu.CompilerParams(
            dimension_semantics=("parallel", "arbitrary"),
            vmem_limit_bytes=a_vmem),
    )(bow, gu_p, eps_p,
      fused["enc_w"], fused["enc_b"],
      fused["xe_last_w"], fused["xe_last_b"],
      fused["ce_last_w"], fused["ce_last_b"],
      fused["q_w"], fused["q_b"],
      fused["d_w"], fused["d_b"],
      fused["z_w"], fused["z_b"])

    # ---------------------------- kernel B: vocab heads ----------------------------
    kB = functools.partial(_vocab_head_kernel, D=D, K=K)
    b_in_specs = [
        pl.BlockSpec((TB, L), lambda b, v: (b, 0)),
        pl.BlockSpec((D, TV), lambda b, v: (0, v)),
        pl.BlockSpec((K, TV), lambda b, v: (0, v)),
        pl.BlockSpec((1, TV), lambda b, v: (0, v)),
        pl.BlockSpec((D + K, TV), lambda b, v: (0, v)),
    ]
    b_out_specs = (
        pl.BlockSpec((TB, TV), lambda b, v: (b, v)),
        pl.BlockSpec((TB, TV), lambda b, v: (b, v)),
        pl.BlockSpec((TB, TV), lambda b, v: (b, v)),
    )
    b_out_shapes = (
        jax.ShapeDtypeStruct((B, V), f32),
        jax.ShapeDtypeStruct((B, V), f32),
        jax.ShapeDtypeStruct((B, V), f32),
    )
    b_blocks = [((TB, L), f32), ((D, TV), bf16), ((K, TV), bf16),
                ((1, TV), f32), ((D + K, TV), bf16),
                ((TB, TV), f32), ((TB, TV), f32), ((TB, TV), f32)]
    b_vmem = _vmem_limit_bytes(b_blocks)

    x_out, c_out, dec_out = pl.pallas_call(
        kB,
        grid=(n_b, n_v),
        in_specs=b_in_specs,
        out_specs=b_out_specs,
        out_shape=b_out_shapes,
        compiler_params=pltpu.CompilerParams(
            dimension_semantics=("parallel", "parallel"),
            vmem_limit_bytes=b_vmem),
    )(lhs, fused["xd_w"], fused["cd_w"], fused["cd_b"], fused["dec_w"])

    # -------------------- wrapper-side glue: slice the slab --------------------
    off_qd = 0
    off_sd = Dp
    off_gd = 2 * Dp
    off_zmu = 3 * Dp
    off_zlv = 3 * Dp + Kp
    off_sz = 3 * Dp + 2 * Kp
    off_gc = 3 * Dp + 3 * Kp
    off_ids = 3 * Dp + 4 * Kp

    qd_logits = slab[:, off_qd:off_qd + D]
    sample_d = slab[:, off_sd:off_sd + D]
    gen_d = slab[:, off_gd:off_gd + D]
    z_mu = slab[:, off_zmu:off_zmu + K]
    z_logvar = slab[:, off_zlv:off_zlv + K]
    sample_z = slab[:, off_sz:off_sz + K]
    gen_c = slab[:, off_gc:off_gc + K]
    d_ids = slab[:, off_ids:off_ids + d_size].astype(jnp.int32)   # [B, d_size]

    memory_scale = jnp.concatenate([sample_d, sample_z], axis=1)  # [B, D+K]

    vae_d_resp = dict(qd_logits=qd_logits, sample_d=sample_d, d_ids=d_ids,
                      gen_d=gen_d, x_out=x_out)
    vae_t_resp = dict(sample_z=sample_z, z_mu=z_mu, z_logvar=z_logvar,
                      gen_c=gen_c, c_out=c_out)
    return vae_d_resp, vae_t_resp, dec_out, memory_scale


# ----------------------------------------------------------------------------
# Pure-JAX reference (mirrors the kernel's bf16 quantization of V-dim tensors;
# the gumbel-softmax divide in the kernel is the EUP approximate reciprocal, so
# the sample_d-derived outputs are compared with a looser tolerance).
# ----------------------------------------------------------------------------
def reference_forward(bow, gumbel_u, eps_z, p):
    f32 = jnp.float32
    bf16 = jnp.bfloat16

    def lin(x, w, b=None):
        y = jnp.dot(x, w, preferred_element_type=f32)
        return y if b is None else y + b

    bow_q = bow.astype(bf16)
    qd_logits = (lin(jnp.tanh(lin(bow_q, p["xe_fc_w"].astype(bf16), p["xe_fc_b"])),
                     p["xe_last_w"], p["xe_last_b"])
                 + lin(bow_q, p["xe_es_w"].astype(bf16), p["xe_es_b"]))
    g = -jnp.log(-jnp.log(gumbel_u + 1e-20) + 1e-20)
    y = qd_logits[None] + g
    soft = jax.nn.softmax(y, axis=-1)
    d_ids = jnp.argmax(y, axis=-1).astype(jnp.int32).T
    sample_d = soft.mean(0)
    gen_d = lin(sample_d, p["xg_w"], p["xg_b"])
    x_out = lin(gen_d.astype(bf16), p["xd_w"].astype(bf16))
    ctx_out = jnp.tanh(lin(jnp.tanh(lin(bow_q, p["ce_fc_w"].astype(bf16), p["ce_fc_b"])),
                           p["ce_last_w"], p["ce_last_b"])
                       + lin(bow_q, p["ce_es_w"].astype(bf16), p["ce_es_b"]))
    z_mu = lin(ctx_out, p["qmu_w"], p["qmu_b"])
    z_logvar = lin(ctx_out, p["qlv_w"], p["qlv_b"])
    sample_z = eps_z * jnp.exp(0.5 * z_logvar) + z_mu
    gen_c = lin(sample_z, p["cg_w"], p["cg_b"])
    c_out = lin(gen_c.astype(bf16), p["cd_w"].astype(bf16), p["cd_b"])
    gd = lin(sample_d, p["xdc_w"], p["xdc_b"])
    gc = lin(sample_z, p["cdc_w"], p["cdc_b"])
    dec_out = lin(jnp.concatenate([gd, gc], axis=1).astype(bf16),
                  p["dec_w"].astype(bf16))
    memory_scale = jnp.concatenate([sample_d, sample_z], axis=1)
    return dict(qd_logits=qd_logits, sample_d=sample_d, d_ids=d_ids, gen_d=gen_d,
                x_out=x_out, z_mu=z_mu, z_logvar=z_logvar, sample_z=sample_z,
                gen_c=gen_c, c_out=c_out, dec_out=dec_out, memory_scale=memory_scale)


if __name__ == "__main__":
    # Small shapes that still exercise every tiling path: 2 batch tiles,
    # 2 V-reduction steps in kernel A, 2 V-output tiles in kernel B.
    B, V, H, D, K, d_size = 16, 256, 32, 16, 16, 4

    root = jax.random.PRNGKey(0)
    k_bow, k_gum, k_eps, k_par = jax.random.split(root, 4)

    bow = jax.random.uniform(k_bow, (B, V), jnp.float32, 0.0, 2.0)      # bag-of-words
    gumbel_u = jax.random.uniform(k_gum, (d_size, B, D), jnp.float32)   # torch.rand
    eps_z = jax.random.normal(k_eps, (B, K), jnp.float32)               # torch.randn_like
    params = init_params(k_par, V, H, D, K)

    # One-time fusion/padding/casts, hoisted out of the per-call path.
    fused, dims = prepare_fused_params(params)

    vae_d, vae_t, dec_out, memory_scale = topic_discourse_forward(
        bow, gumbel_u, eps_z, fused, dims, vk_tile=128, vout_tile=128)
    jax.block_until_ready(dec_out)
    jax.block_until_ready(memory_scale)

    # correctness check against a pure-JAX reference
    ref = reference_forward(bow, gumbel_u, eps_z, params)
    got = dict(vae_d)
    got.update(vae_t)
    got["dec_out"] = dec_out
    got["memory_scale"] = memory_scale

    tight = dict(atol=2e-4, rtol=2e-4)
    # sample_d path uses the EUP approximate reciprocal and the V-wide heads
    # re-round their small LHS to bf16, so those comparisons are looser.
    loose = dict(atol=1e-2, rtol=1e-2)
    tol = {"qd_logits": tight, "z_mu": tight, "z_logvar": tight, "sample_z": tight,
           "gen_c": tight,
           "sample_d": loose, "gen_d": loose, "memory_scale": loose,
           "x_out": loose, "c_out": loose, "dec_out": loose}
    for name, r in ref.items():
        g = got[name]
        assert g.shape == r.shape, f"shape mismatch in {name}: {g.shape} vs {r.shape}"
        if name == "d_ids":
            assert bool(jnp.all(g == r)), f"mismatch in {name}"
        else:
            assert jnp.allclose(g, r, **tol[name]), f"mismatch in {name}"

    print("KERNEL_OK")
</pallas_src>

<mosaic_0001>
module attributes {stable_mosaic.version = 11 : i64} {
  func.func @_encoder_head_kernel(%arg0: i32, %arg1: i32, %arg2: memref<8x128xf32, #tpu.memory_space<vmem>>, %arg3: memref<4x8x128xf32, #tpu.memory_space<vmem>>, %arg4: memref<8x128xf32, #tpu.memory_space<vmem>>, %arg5: memref<128x512xbf16, #tpu.memory_space<vmem>>, %arg6: memref<1x512xf32, #tpu.memory_space<vmem>>, %arg7: memref<128x128xf32, #tpu.memory_space<vmem>>, %arg8: memref<1x128xf32, #tpu.memory_space<vmem>>, %arg9: memref<128x128xf32, #tpu.memory_space<vmem>>, %arg10: memref<1x128xf32, #tpu.memory_space<vmem>>, %arg11: memref<128x256xf32, #tpu.memory_space<vmem>>, %arg12: memref<1x256xf32, #tpu.memory_space<vmem>>, %arg13: memref<128x256xf32, #tpu.memory_space<vmem>>, %arg14: memref<1x256xf32, #tpu.memory_space<vmem>>, %arg15: memref<128x256xf32, #tpu.memory_space<vmem>>, %arg16: memref<1x256xf32, #tpu.memory_space<vmem>>, %arg17: memref<8x1024xf32, #tpu.memory_space<vmem>>, %arg18: memref<8x64xf32, #tpu.memory_space<vmem>>, %arg19: memref<8x512xf32, #tpu.memory_space<vmem>>) attributes {dimension_semantics = [#tpu.dimension_semantics<parallel>, #tpu.dimension_semantics<arbitrary>], iteration_bounds = array<i64: 2, 2>, scalar_prefetch = 0 : i64, scratch_operands = 1 : i64, tpu.core_type = #tpu.core_type<tc>, window_params = [{transform_indices = @transform_0, window_bounds = array<i64: 8, 128>}, {transform_indices = @transform_1, window_bounds = array<i64: 4, 8, 128>}, {transform_indices = @transform_2, window_bounds = array<i64: 8, 128>}, {transform_indices = @transform_3, window_bounds = array<i64: 128, 512>}, {pipeline_mode = #tpu.pipeline_mode<synchronous>, transform_indices = @transform_4, window_bounds = array<i64: 1, 512>}, {pipeline_mode = #tpu.pipeline_mode<synchronous>, transform_indices = @transform_5, window_bounds = array<i64: 128, 128>}, {pipeline_mode = #tpu.pipeline_mode<synchronous>, transform_indices = @transform_6, window_bounds = array<i64: 1, 128>}, {pipeline_mode = #tpu.pipeline_mode<synchronous>, transform_indices = @transform_7, window_bounds = array<i64: 128, 128>}, {pipeline_mode = #tpu.pipeline_mode<synchronous>, transform_indices = @transform_8, window_bounds = array<i64: 1, 128>}, {pipeline_mode = #tpu.pipeline_mode<synchronous>, transform_indices = @transform_9, window_bounds = array<i64: 128, 256>}, {pipeline_mode = #tpu.pipeline_mode<synchronous>, transform_indices = @transform_10, window_bounds = array<i64: 1, 256>}, {pipeline_mode = #tpu.pipeline_mode<synchronous>, transform_indices = @transform_11, window_bounds = array<i64: 128, 256>}, {pipeline_mode = #tpu.pipeline_mode<synchronous>, transform_indices = @transform_12, window_bounds = array<i64: 1, 256>}, {pipeline_mode = #tpu.pipeline_mode<synchronous>, transform_indices = @transform_13, window_bounds = array<i64: 128, 256>}, {pipeline_mode = #tpu.pipeline_mode<synchronous>, transform_indices = @transform_14, window_bounds = array<i64: 1, 256>}, {transform_indices = @transform_15, window_bounds = array<i64: 8, 1024>}, {transform_indices = @transform_16, window_bounds = array<i64: 8, 64>}]} {
    %c0_i32 = arith.constant 0 : i32
    %0 = arith.cmpi eq, %arg1, %c0_i32 : i32
    %1 = arith.extui %0 : i1 to i32
    %c0_i32_0 = arith.constant 0 : i32
    %2 = arith.cmpi ne, %1, %c0_i32_0 : i32
    scf.if %2 {
      %cst_9 = arith.constant 0.000000e+00 : f32
      %13 = vector.broadcast %cst_9 : f32 to vector<8x512xf32>
      %c0_10 = arith.constant 0 : index
      %c0_11 = arith.constant 0 : index
      %14 = vector.load %arg19[%c0_10, %c0_11] : memref<8x512xf32, #tpu.memory_space<vmem>>, vector<8x512xf32>
      tpu.vector_store %arg19[%c0_10, %c0_11], %13 {strides = array<i32>} : memref<8x512xf32, #tpu.memory_space<vmem>>, vector<8x512xf32>,
    } else {
    }
    %c0 = arith.constant 0 : index
    %c0_1 = arith.constant 0 : index
    %3 = vector.load %arg19[%c0, %c0_1] : memref<8x512xf32, #tpu.memory_space<vmem>>, vector<8x512xf32>
    %c0_2 = arith.constant 0 : index
    %c0_3 = arith.constant 0 : index
    %4 = vector.load %arg2[%c0_2, %c0_3] : memref<8x128xf32, #tpu.memory_space<vmem>>, vector<8x128xf32>
    %5 = arith.truncf %4 : vector<8x128xf32> to vector<8x128xbf16>
    %c0_4 = arith.constant 0 : index
    %c0_5 = arith.constant 0 : index
    %6 = vector.load %arg5[%c0_4, %c0_5] : memref<128x512xbf16, #tpu.memory_space<vmem>>, vector<128x512xbf16>
    %cst = arith.constant dense<0.000000e+00> : vector<8x512xf32>
    %7 = tpu.matmul %5, %6, %cst {dimension_numbers = #tpu.dot_dimension_numbers<[1], [0], [0], [1], [0, 0, 1, 1], [], []>} : vector<8x128xbf16>, vector<128x512xbf16>, vector<8x512xf32> -> vector<8x512xf32>
    %8 = arith.addf %3, %7 : vector<8x512xf32>
    %c0_6 = arith.constant 0 : index
    %c0_7 = arith.constant 0 : index
    %9 = vector.load %arg19[%c0_6, %c0_7] : memref<8x512xf32, #tpu.memory_space<vmem>>, vector<8x512xf32>
    tpu.vector_store %arg19[%c0_6, %c0_7], %8 {strides = array<i32>} : memref<8x512xf32, #tpu.memory_space<vmem>>, vector<8x512xf32>,
    %c1_i32 = arith.constant 1 : i32
    %10 = arith.cmpi eq, %arg1, %c1_i32 : i32
    %11 = arith.extui %10 : i1 to i32
    %c0_i32_8 = arith.constant 0 : i32
    %12 = arith.cmpi ne, %11, %c0_i32_8 : i32
    scf.if %12 {
      %c0_9 = arith.constant 0 : index
      %c0_10 = arith.constant 0 : index
      %13 = vector.load %arg19[%c0_9, %c0_10] : memref<8x512xf32, #tpu.memory_space<vmem>>, vector<8x512xf32>
      %c0_11 = arith.constant 0 : index
      %c0_12 = arith.constant 0 : index
      %14 = vector.load %arg6[%c0_11, %c0_12] : memref<1x512xf32, #tpu.memory_space<vmem>>, vector<1x512xf32>
      %15 = vector.broadcast %14 : vector<1x512xf32> to vector<8x512xf32>
      %16 = arith.addf %13, %15 : vector<8x512xf32>
      %17 = vector.extract_strided_slice %16 {offsets = [0, 0], sizes = [8, 128], strides = [1, 1]} : vector<8x512xf32> to vector<8x128xf32>
      %18 = math.tanh %17 : vector<8x128xf32>
      %19 = vector.extract_strided_slice %16 {offsets = [0, 128], sizes = [8, 128], strides = [1, 1]} : vector<8x512xf32> to vector<8x128xf32>
      %20 = vector.extract_strided_slice %16 {offsets = [0, 256], sizes = [8, 128], strides = [1, 1]} : vector<8x512xf32> to vector<8x128xf32>
      %21 = math.tanh %20 : vector<8x128xf32>
      %22 = vector.extract_strided_slice %16 {offsets = [0, 384], sizes = [8, 128], strides = [1, 1]} : vector<8x512xf32> to vector<8x128xf32>
      %c0_13 = arith.constant 0 : index
      %c0_14 = arith.constant 0 : index
      %23 = vector.load %arg7[%c0_13, %c0_14] : memref<128x128xf32, #tpu.memory_space<vmem>>, vector<128x128xf32>
      %cst_15 = arith.constant dense<0.000000e+00> : vector<8x128xf32>
      %24 = tpu.matmul %18, %23, %cst_15 {dimension_numbers = #tpu.dot_dimension_numbers<[1], [0], [0], [1], [0, 0, 1, 1], [], []>} : vector<8x128xf32>, vector<128x128xf32>, vector<8x128xf32> -> vector<8x128xf32>
      %c0_16 = arith.constant 0 : index
      %c0_17 = arith.constant 0 : index
      %25 = vector.load %arg8[%c0_16, %c0_17] : memref<1x128xf32, #tpu.memory_space<vmem>>, vector<1x128xf32>
      %26 = vector.broadcast %25 : vector<1x128xf32> to vector<8x128xf32>
      %27 = arith.addf %24, %26 : vector<8x128xf32>
      %28 = arith.addf %27, %19 : vector<8x128xf32>
      %c0_18 = arith.constant 0 : index
      %c0_19 = arith.constant 0 : index
      %c0_20 = arith.constant 0 : index
      %29 = vector.load %arg3[%c0_18, %c0_19, %c0_20] : memref<4x8x128xf32, #tpu.memory_space<vmem>>, vector<4x8x128xf32>
      %cst_21 = arith.constant 9.99999968E-21 : f32
      %30 = vector.broadcast %cst_21 : f32 to vector<4x8x128xf32>
      %31 = arith.addf %29, %30 : vector<4x8x128xf32>
      %32 = math.log %31 : vector<4x8x128xf32>
      %cst_22 = arith.constant 0.000000e+00 : f32
      %33 = vector.broadcast %cst_22 : f32 to vector<4x8x128xf32>
      %34 = arith.subf %33, %32 : vector<4x8x128xf32>
      %cst_23 = arith.constant 9.99999968E-21 : f32
      %35 = vector.broadcast %cst_23 : f32 to vector<4x8x128xf32>
      %36 = arith.addf %34, %35 : vector<4x8x128xf32>
      %37 = math.log %36 : vector<4x8x128xf32>
      %cst_24 = arith.constant 0.000000e+00 : f32
      %38 = vector.broadcast %cst_24 : f32 to vector<4x8x128xf32>
      %39 = arith.subf %38, %37 : vector<4x8x128xf32>
      %40 = tpu.iota {dimensions = array<i32: 2>} : vector<4x8x128xi32>
      %c16_i32 = arith.constant 16 : i32
      %41 = vector.broadcast %c16_i32 : i32 to vector<4x8x128xi32>
      %42 = arith.cmpi slt, %40, %41 : vector<4x8x128xi32>
      %43 = vector.shape_cast %28 : vector<8x128xf32> to vector<1x8x128xf32>
      %44 = vector.broadcast %43 : vector<1x8x128xf32> to vector<4x8x128xf32>
      %45 = arith.addf %44, %39 : vector<4x8x128xf32>
      %cst_25 = arith.constant -1.000000e+30 : f32
      %46 = vector.broadcast %cst_25 : f32 to vector<4x8x128xf32>
      %47 = arith.select %42, %45, %46 : vector<4x8x128xi1>, vector<4x8x128xf32>
      %cst_26 = arith.constant dense<0xFF800000> : vector<4x8xf32>
      %48 = vector.multi_reduction <maximumf>, %47, %cst_26 [2] : vector<4x8x128xf32> to vector<4x8xf32>
      %49 = vector.shape_cast %48 : vector<4x8xf32> to vector<4x8x1xf32>
      %50 = tpu.iota {dimensions = array<i32: 1>} : vector<8x128xi32>
      %51 = vector.extract_strided_slice %47 {offsets = [0, 0, 0], sizes = [1, 8, 128], strides = [1, 1, 1]} : vector<4x8x128xf32> to vector<1x8x128xf32>
      %52 = vector.shape_cast %51 : vector<1x8x128xf32> to vector<8x128xf32>
      %53 = vector.extract_strided_slice %49 {offsets = [0, 0, 0], sizes = [1, 8, 1], strides = [1, 1, 1]} : vector<4x8x1xf32> to vector<1x8x1xf32>
      %54 = vector.shape_cast %53 : vector<1x8x1xf32> to vector<8x1xf32>
      %55 = vector.broadcast %54 : vector<8x1xf32> to vector<8x128xf32>
      %56 = arith.cmpf oge, %52, %55 : vector<8x128xf32>
      %c128_i32 = arith.constant 128 : i32
      %57 = vector.broadcast %c128_i32 : i32 to vector<8x128xi32>
      %58 = arith.select %56, %50, %57 : vector<8x128xi1>, vector<8x128xi32>
      %cst_27 = arith.constant dense<2147483647> : vector<8xi32>
      %59 = vector.multi_reduction <minsi>, %58, %cst_27 [1] : vector<8x128xi32> to vector<8xi32>
      %60 = vector.shape_cast %59 : vector<8xi32> to vector<8x1xi32>
      %61 = vector.extract_strided_slice %47 {offsets = [1, 0, 0], sizes = [1, 8, 128], strides = [1, 1, 1]} : vector<4x8x128xf32> to vector<1x8x128xf32>
      %62 = vector.shape_cast %61 : vector<1x8x128xf32> to vector<8x128xf32>
      %63 = vector.extract_strided_slice %49 {offsets = [1, 0, 0], sizes = [1, 8, 1], strides = [1, 1, 1]} : vector<4x8x1xf32> to vector<1x8x1xf32>
      %64 = vector.shape_cast %63 : vector<1x8x1xf32> to vector<8x1xf32>
      %65 = vector.broadcast %64 : vector<8x1xf32> to vector<8x128xf32>
      %66 = arith.cmpf oge, %62, %65 : vector<8x128xf32>
      %c128_i32_28 = arith.constant 128 : i32
      %67 = vector.broadcast %c128_i32_28 : i32 to vector<8x128xi32>
      %68 = arith.select %66, %50, %67 : vector<8x128xi1>, vector<8x128xi32>
      %cst_29 = arith.constant dense<2147483647> : vector<8xi32>
      %69 = vector.multi_reduction <minsi>, %68, %cst_29 [1] : vector<8x128xi32> to vector<8xi32>
      %70 = vector.shape_cast %69 : vector<8xi32> to vector<8x1xi32>
      %71 = vector.extract_strided_slice %47 {offsets = [2, 0, 0], sizes = [1, 8, 128], strides = [1, 1, 1]} : vector<4x8x128xf32> to vector<1x8x128xf32>
      %72 = vector.shape_cast %71 : vector<1x8x128xf32> to vector<8x128xf32>
      %73 = vector.extract_strided_slice %49 {offsets = [2, 0, 0], sizes = [1, 8, 1], strides = [1, 1, 1]} : vector<4x8x1xf32> to vector<1x8x1xf32>
      %74 = vector.shape_cast %73 : vector<1x8x1xf32> to vector<8x1xf32>
      %75 = vector.broadcast %74 : vector<8x1xf32> to vector<8x128xf32>
      %76 = arith.cmpf oge, %72, %75 : vector<8x128xf32>
      %c128_i32_30 = arith.constant 128 : i32
      %77 = vector.broadcast %c128_i32_30 : i32 to vector<8x128xi32>
      %78 = arith.select %76, %50, %77 : vector<8x128xi1>, vector<8x128xi32>
      %cst_31 = arith.constant dense<2147483647> : vector<8xi32>
      %79 = vector.multi_reduction <minsi>, %78, %cst_31 [1] : vector<8x128xi32> to vector<8xi32>
      %80 = vector.shape_cast %79 : vector<8xi32> to vector<8x1xi32>
      %81 = vector.extract_strided_slice %47 {offsets = [3, 0, 0], sizes = [1, 8, 128], strides = [1, 1, 1]} : vector<4x8x128xf32> to vector<1x8x128xf32>
      %82 = vector.shape_cast %81 : vector<1x8x128xf32> to vector<8x128xf32>
      %83 = vector.extract_strided_slice %49 {offsets = [3, 0, 0], sizes = [1, 8, 1], strides = [1, 1, 1]} : vector<4x8x1xf32> to vector<1x8x1xf32>
      %84 = vector.shape_cast %83 : vector<1x8x1xf32> to vector<8x1xf32>
      %85 = vector.broadcast %84 : vector<8x1xf32> to vector<8x128xf32>
      %86 = arith.cmpf oge, %82, %85 : vector<8x128xf32>
      %c128_i32_32 = arith.constant 128 : i32
      %87 = vector.broadcast %c128_i32_32 : i32 to vector<8x128xi32>
      %88 = arith.select %86, %50, %87 : vector<8x128xi1>, vector<8x128xi32>
      %cst_33 = arith.constant dense<2147483647> : vector<8xi32>
      %89 = vector.multi_reduction <minsi>, %88, %cst_33 [1] : vector<8x128xi32> to vector<8xi32>
      %90 = vector.shape_cast %89 : vector<8xi32> to vector<8x1xi32>
      %91 = tpu.concatenate %60, %70, %80, %90 in 1 : vector<8x1xi32>, vector<8x1xi32>, vector<8x1xi32>, vector<8x1xi32> -> vector<8x4xi32>
      %92 = arith.sitofp %91 : vector<8x4xi32> to vector<8x4xf32>
      %cst_34 = arith.constant 0.000000e+00 : f32
      %93 = vector.broadcast %cst_34 : f32 to vector<8x124xf32>
      %94 = tpu.concatenate %92, %93 in 1 : vector<8x4xf32>, vector<8x124xf32> -> vector<8x128xf32>
      %95 = vector.broadcast %49 : vector<4x8x1xf32> to vector<4x8x128xf32>
      %96 = arith.subf %47, %95 : vector<4x8x128xf32>
      %97 = math.exp %96 : vector<4x8x128xf32>
      %cst_35 = arith.constant dense<0.000000e+00> : vector<4x8xf32>
      %98 = vector.multi_reduction <add>, %97, %cst_35 [2] : vector<4x8x128xf32> to vector<4x8xf32>
      %99 = vector.shape_cast %98 : vector<4x8xf32> to vector<4x8x1xf32>
      %100 = tpu.reciprocal %99 {approx = true} : vector<4x8x1xf32> -> vector<4x8x1xf32>
      %101 = vector.broadcast %100 : vector<4x8x1xf32> to vector<4x8x128xf32>
      %102 = arith.mulf %97, %101 : vector<4x8x128xf32>
      %cst_36 = arith.constant dense<0.000000e+00> : vector<8x128xf32>
      %103 = vector.multi_reduction <add>, %102, %cst_36 [0] : vector<4x8x128xf32> to vector<8x128xf32>
      %cst_37 = arith.constant 4.000000e+00 : f32
      %104 = vector.broadcast %cst_37 : f32 to vector<8x128xf32>
      %105 = arith.divf %103, %104 : vector<8x128xf32>
      %c0_38 = arith.constant 0 : index
      %c0_39 = arith.constant 0 : index
      %106 = vector.load %arg9[%c0_38, %c0_39] : memref<128x128xf32, #tpu.memory_space<vmem>>, vector<128x128xf32>
      %cst_40 = arith.constant dense<0.000000e+00> : vector<8x128xf32>
      %107 = tpu.matmul %21, %106, %cst_40 {dimension_numbers = #tpu.dot_dimension_numbers<[1], [0], [0], [1], [0, 0, 1, 1], [], []>} : vector<8x128xf32>, vector<128x128xf32>, vector<8x128xf32> -> vector<8x128xf32>
      %c0_41 = arith.constant 0 : index
      %c0_42 = arith.constant 0 : index
      %108 = vector.load %arg10[%c0_41, %c0_42] : memref<1x128xf32, #tpu.memory_space<vmem>>, vector<1x128xf32>
      %109 = vector.broadcast %108 : vector<1x128xf32> to vector<8x128xf32>
      %110 = arith.addf %107, %109 : vector<8x128xf32>
      %111 = arith.addf %110, %22 : vector<8x128xf32>
      %112 = math.tanh %111 : vector<8x128xf32>
      %c0_43 = arith.constant 0 : index
      %c0_44 = arith.constant 0 : index
      %113 = vector.load %arg11[%c0_43, %c0_44] : memref<128x256xf32, #tpu.memory_space<vmem>>, vector<128x256xf32>
      %cst_45 = arith.constant dense<0.000000e+00> : vector<8x256xf32>
      %114 = tpu.matmul %112, %113, %cst_45 {dimension_numbers = #tpu.dot_dimension_numbers<[1], [0], [0], [1], [0, 0, 1, 1], [], []>} : vector<8x128xf32>, vector<128x256xf32>, vector<8x256xf32> -> vector<8x256xf32>
      %c0_46 = arith.constant 0 : index
      %c0_47 = arith.constant 0 : index
      %115 = vector.load %arg12[%c0_46, %c0_47] : memref<1x256xf32, #tpu.memory_space<vmem>>, vector<1x256xf32>
      %116 = vector.broadcast %115 : vector<1x256xf32> to vector<8x256xf32>
      %117 = arith.addf %114, %116 : vector<8x256xf32>
      %118 = vector.extract_strided_slice %117 {offsets = [0, 0], sizes = [8, 128], strides = [1, 1]} : vector<8x256xf32> to vector<8x128xf32>
      %119 = vector.extract_strided_slice %117 {offsets = [0, 128], sizes = [8, 128], strides = [1, 1]} : vector<8x256xf32> to vector<8x128xf32>
      %c0_48 = arith.constant 0 : index
      %c0_49 = arith.constant 0 : index
      %120 = vector.load %arg4[%c0_48, %c0_49] : memref<8x128xf32, #tpu.memory_space<vmem>>, vector<8x128xf32>
      %cst_50 = arith.constant 5.000000e-01 : f32
      %121 = vector.broadcast %cst_50 : f32 to vector<8x128xf32>
      %122 = arith.mulf %121, %119 : vector<8x128xf32>
      %123 = math.exp %122 : vector<8x128xf32>
      %124 = arith.mulf %120, %123 : vector<8x128xf32>
      %125 = arith.addf %124, %118 : vector<8x128xf32>
      %c0_51 = arith.constant 0 : index
      %c0_52 = arith.constant 0 : index
      %126 = vector.load %arg13[%c0_51, %c0_52] : memref<128x256xf32, #tpu.memory_space<vmem>>, vector<128x256xf32>
      %cst_53 = arith.constant dense<0.000000e+00> : vector<8x256xf32>
      %127 = tpu.matmul %105, %126, %cst_53 {dimension_numbers = #tpu.dot_dimension_numbers<[1], [0], [0], [1], [0, 0, 1, 1], [], []>} : vector<8x128xf32>, vector<128x256xf32>, vector<8x256xf32> -> vector<8x256xf32>
      %c0_54 = arith.constant 0 : index
      %c0_55 = arith.constant 0 : index
      %128 = vector.load %arg14[%c0_54, %c0_55] : memref<1x256xf32, #tpu.memory_space<vmem>>, vector<1x256xf32>
      %129 = vector.broadcast %128 : vector<1x256xf32> to vector<8x256xf32>
      %130 = arith.addf %127, %129 : vector<8x256xf32>
      %131 = vector.extract_strided_slice %130 {offsets = [0, 0], sizes = [8, 128], strides = [1, 1]} : vector<8x256xf32> to vector<8x128xf32>
      %132 = vector.extract_strided_slice %130 {offsets = [0, 128], sizes = [8, 128], strides = [1, 1]} : vector<8x256xf32> to vector<8x128xf32>
      %c0_56 = arith.constant 0 : index
      %c0_57 = arith.constant 0 : index
      %133 = vector.load %arg15[%c0_56, %c0_57] : memref<128x256xf32, #tpu.memory_space<vmem>>, vector<128x256xf32>
      %cst_58 = arith.constant dense<0.000000e+00> : vector<8x256xf32>
      %134 = tpu.matmul %125, %133, %cst_58 {dimension_numbers = #tpu.dot_dimension_numbers<[1], [0], [0], [1], [0, 0, 1, 1], [], []>} : vector<8x128xf32>, vector<128x256xf32>, vector<8x256xf32> -> vector<8x256xf32>
      %c0_59 = arith.constant 0 : index
      %c0_60 = arith.constant 0 : index
      %135 = vector.load %arg16[%c0_59, %c0_60] : memref<1x256xf32, #tpu.memory_space<vmem>>, vector<1x256xf32>
      %136 = vector.broadcast %135 : vector<1x256xf32> to vector<8x256xf32>
      %137 = arith.addf %134, %136 : vector<8x256xf32>
      %138 = vector.extract_strided_slice %137 {offsets = [0, 0], sizes = [8, 128], strides = [1, 1]} : vector<8x256xf32> to vector<8x128xf32>
      %139 = vector.extract_strided_slice %137 {offsets = [0, 128], sizes = [8, 128], strides = [1, 1]} : vector<8x256xf32> to vector<8x128xf32>
      %140 = tpu.concatenate %28, %105, %131, %118, %119, %125, %138, %94 in 1 : vector<8x128xf32>, vector<8x128xf32>, vector<8x128xf32>, vector<8x128xf32>, vector<8x128xf32>, vector<8x128xf32>, vector<8x128xf32>, vector<8x128xf32> -> vector<8x1024xf32>
      %c0_61 = arith.constant 0 : index
      %c0_62 = arith.constant 0 : index
      %141 = vector.load %arg17[%c0_61, %c0_62] : memref<8x1024xf32, #tpu.memory_space<vmem>>, vector<8x1024xf32>
      tpu.vector_store %arg17[%c0_61, %c0_62], %140 {strides = array<i32>} : memref<8x1024xf32, #tpu.memory_space<vmem>>, vector<8x1024xf32>,
      %142 = vector.extract_strided_slice %132 {offsets = [0, 0], sizes = [8, 16], strides = [1, 1]} : vector<8x128xf32> to vector<8x16xf32>
      %143 = vector.extract_strided_slice %139 {offsets = [0, 0], sizes = [8, 16], strides = [1, 1]} : vector<8x128xf32> to vector<8x16xf32>
      %144 = vector.extract_strided_slice %131 {offsets = [0, 0], sizes = [8, 16], strides = [1, 1]} : vector<8x128xf32> to vector<8x16xf32>
      %145 = vector.extract_strided_slice %138 {offsets = [0, 0], sizes = [8, 16], strides = [1, 1]} : vector<8x128xf32> to vector<8x16xf32>
      %146 = tpu.concatenate %142, %143, %144, %145 in 1 : vector<8x16xf32>, vector<8x16xf32>, vector<8x16xf32>, vector<8x16xf32> -> vector<8x64xf32>
      %c0_63 = arith.constant 0 : index
      %c0_64 = arith.constant 0 : index
      %147 = vector.load %arg18[%c0_63, %c0_64] : memref<8x64xf32, #tpu.memory_space<vmem>>, vector<8x64xf32>
      tpu.vector_store %arg18[%c0_63, %c0_64], %146 {strides = array<i32>} : memref<8x64xf32, #tpu.memory_space<vmem>>, vector<8x64xf32>,
    } else {
    }
    return
  }
  func.func @transform_0(%arg0: i32, %arg1: i32) -> (i32, i32) {
    %c0_i32 = arith.constant 0 : i32
    return %arg0, %arg1 : i32, i32
  }
  func.func @transform_1(%arg0: i32, %arg1: i32) -> (i32, i32, i32) {
    %c0_i32 = arith.constant 0 : i32
    %c0_i32_0 = arith.constant 0 : i32
    %c0_i32_1 = arith.constant 0 : i32
    return %c0_i32, %arg0, %c0_i32_0 : i32, i32, i32
  }
  func.func @transform_2(%arg0: i32, %arg1: i32) -> (i32, i32) {
    %c0_i32 = arith.constant 0 : i32
    %c0_i32_0 = arith.constant 0 : i32
    return %arg0, %c0_i32 : i32, i32
  }
  func.func @transform_3(%arg0: i32, %arg1: i32) -> (i32, i32) {
    %c0_i32 = arith.constant 0 : i32
    %c0_i32_0 = arith.constant 0 : i32
    return %arg1, %c0_i32 : i32, i32
  }
  func.func @transform_4(%arg0: i32, %arg1: i32) -> (i32, i32) {
    %c0_i32 = arith.constant 0 : i32
    %c0_i32_0 = arith.constant 0 : i32
    %c0_i32_1 = arith.constant 0 : i32
    return %c0_i32, %c0_i32_0 : i32, i32
  }
  func.func @transform_5(%arg0: i32, %arg1: i32) -> (i32, i32) {
    %c0_i32 = arith.constant 0 : i32
    %c0_i32_0 = arith.constant 0 : i32
    %c0_i32_1 = arith.constant 0 : i32
    return %c0_i32, %c0_i32_0 : i32, i32
  }
  func.func @transform_6(%arg0: i32, %arg1: i32) -> (i32, i32) {
    %c0_i32 = arith.constant 0 : i32
    %c0_i32_0 = arith.constant 0 : i32
    %c0_i32_1 = arith.constant 0 : i32
    return %c0_i32, %c0_i32_0 : i32, i32
  }
  func.func @transform_7(%arg0: i32, %arg1: i32) -> (i32, i32) {
    %c0_i32 = arith.constant 0 : i32
    %c0_i32_0 = arith.constant 0 : i32
    %c0_i32_1 = arith.constant 0 : i32
    return %c0_i32, %c0_i32_0 : i32, i32
  }
  func.func @transform_8(%arg0: i32, %arg1: i32) -> (i32, i32) {
    %c0_i32 = arith.constant 0 : i32
    %c0_i32_0 = arith.constant 0 : i32
    %c0_i32_1 = arith.constant 0 : i32
    return %c0_i32, %c0_i32_0 : i32, i32
  }
  func.func @transform_9(%arg0: i32, %arg1: i32) -> (i32, i32) {
    %c0_i32 = arith.constant 0 : i32
    %c0_i32_0 = arith.constant 0 : i32
    %c0_i32_1 = arith.constant 0 : i32
    return %c0_i32, %c0_i32_0 : i32, i32
  }
  func.func @transform_10(%arg0: i32, %arg1: i32) -> (i32, i32) {
    %c0_i32 = arith.constant 0 : i32
    %c0_i32_0 = arith.constant 0 : i32
    %c0_i32_1 = arith.constant 0 : i32
    return %c0_i32, %c0_i32_0 : i32, i32
  }
  func.func @transform_11(%arg0: i32, %arg1: i32) -> (i32, i32) {
    %c0_i32 = arith.constant 0 : i32
    %c0_i32_0 = arith.constant 0 : i32
    %c0_i32_1 = arith.constant 0 : i32
    return %c0_i32, %c0_i32_0 : i32, i32
  }
  func.func @transform_12(%arg0: i32, %arg1: i32) -> (i32, i32) {
    %c0_i32 = arith.constant 0 : i32
    %c0_i32_0 = arith.constant 0 : i32
    %c0_i32_1 = arith.constant 0 : i32
    return %c0_i32, %c0_i32_0 : i32, i32
  }
  func.func @transform_13(%arg0: i32, %arg1: i32) -> (i32, i32) {
    %c0_i32 = arith.constant 0 : i32
    %c0_i32_0 = arith.constant 0 : i32
    %c0_i32_1 = arith.constant 0 : i32
    return %c0_i32, %c0_i32_0 : i32, i32
  }
  func.func @transform_14(%arg0: i32, %arg1: i32) -> (i32, i32) {
    %c0_i32 = arith.constant 0 : i32
    %c0_i32_0 = arith.constant 0 : i32
    %c0_i32_1 = arith.constant 0 : i32
    return %c0_i32, %c0_i32_0 : i32, i32
  }
  func.func @transform_15(%arg0: i32, %arg1: i32) -> (i32, i32) {
    %c0_i32 = arith.constant 0 : i32
    %c0_i32_0 = arith.constant 0 : i32
    return %arg0, %c0_i32 : i32, i32
  }
  func.func @transform_16(%arg0: i32, %arg1: i32) -> (i32, i32) {
    %c0_i32 = arith.constant 0 : i32
    %c0_i32_0 = arith.constant 0 : i32
    return %arg0, %c0_i32 : i32, i32
  }
}

</mosaic_0001>

<llo_original>
// kernel: tpu_custom_call.1
$region0: #{tpu_custom_call.1}
  #allocation0 [shape = 'u32[]', space=smem, size = 0x4, offset = 0x4, fixed_abs, tag = 'smem constant byte address 0x4 - core index']
  #allocation1 [shape = 'u32[144,128]{1,0:T(1,128)}', space=vmem, size = 0x12000, scoped, tag = 'internal scratch']
  #allocation2 [shape = 'f32[8,512]{1,0:T(8,128)}', space=vmem, size = 0x4000, scoped, tag = 'scratch operand']
  %s0 = inlined_call_operand.hbm [shape: f32[16,256], index: 0, kind: input, shape index: {}]
  %s1 = inlined_call_operand.hbm [shape: f32[4,16,128], index: 1, kind: input, shape index: {}]
  %s2 = inlined_call_operand.hbm [shape: f32[16,128], index: 2, kind: input, shape index: {}]
  %s3 = inlined_call_operand.hbm [shape: bf16[256,512], index: 3, kind: input, shape index: {}]
  %s4 = inlined_call_operand.vmem [shape: f32[1,512], index: 4, kind: input, shape index: {}]
  %s5 = inlined_call_operand.hbm [shape: f32[128,128], index: 5, kind: input, shape index: {}]
  %s6 = inlined_call_operand.hbm [shape: f32[1,128], index: 6, kind: input, shape index: {}]
  %s7 = inlined_call_operand.hbm [shape: f32[128,128], index: 7, kind: input, shape index: {}]
  %s8 = inlined_call_operand.vmem [shape: f32[1,128], index: 8, kind: input, shape index: {}]
  %s9 = inlined_call_operand.hbm [shape: f32[128,256], index: 9, kind: input, shape index: {}]
  %s10 = inlined_call_operand.vmem [shape: f32[1,256], index: 10, kind: input, shape index: {}]
  %s11 = inlined_call_operand.hbm [shape: f32[128,256], index: 11, kind: input, shape index: {}]
  %s12 = inlined_call_operand.vmem [shape: f32[1,256], index: 12, kind: input, shape index: {}]
  %s13 = inlined_call_operand.hbm [shape: f32[128,256], index: 13, kind: input, shape index: {}]
  %s14 = inlined_call_operand.vmem [shape: f32[1,256], index: 14, kind: input, shape index: {}]
  %s15 = inlined_call_operand.hbm [shape: f32[16,1024], index: 15, kind: output, shape index: {0}]
  %s16 = inlined_call_operand.hbm [shape: f32[16,64], index: 16, kind: output, shape index: {1}]
  %17 = xla_tuple %s15, %s16
  %s18 = sld [smem:[#allocation0]]
  $region149: #{tpu_custom_call.1} parent=0
    _
  %s20 = ssub.s32 1, %s18
  %s21 = scalar_select 0, %s20, %s18
  $region1: #{tpu_custom_call.1} parent=0
    #allocation3 [shape = 'u8[8192]{0}', space=vmem, size = 0x2000, scoped, tag = 'input window, operand 0']
    #allocation4 [shape = 's32[2]{0}', space=sflag, size = 0x8, scoped, tag = 'scoped memory for tpu_custom_call.1']
    #allocation5 [shape = 's32[2]{0}', space=sflag, size = 0x8, scoped, tag = 'scoped memory for tpu_custom_call.1']
    #allocation6 [shape = 'u8[32768]{0}', space=vmem, size = 0x8000, scoped, tag = 'input window, operand 1']
    #allocation7 [shape = 's32[2]{0}', space=sflag, size = 0x8, scoped, tag = 'scoped memory for tpu_custom_call.1']
    #allocation8 [shape = 'u8[8192]{0}', space=vmem, size = 0x2000, scoped, tag = 'input window, operand 2']
    #allocation9 [shape = 'u8[262144]{0}', space=vmem, size = 0x40000, scoped, tag = 'input window, operand 3']
    #allocation10 [shape = 's32[2]{0}', space=sflag, size = 0x8, scoped, tag = 'scoped memory for tpu_custom_call.1']
    #allocation11 [shape = 'u8[65536]{0}', space=vmem, size = 0x10000, scoped, tag = 'input window, operand 5, single buffered']
    #allocation12 [shape = 'u8[512]{0}', space=vmem, size = 0x400, scoped, tag = 'input window, operand 6, single buffered']
    #allocation13 [shape = 's32[1]{0}', space=sflag, size = 0x4, scoped, tag = 'scoped memory for tpu_custom_call.1']
    #allocation14 [shape = 'u8[65536]{0}', space=vmem, size = 0x10000, scoped, tag = 'input window, operand 7, single buffered']
    #allocation15 [shape = 'u8[131072]{0}', space=vmem, size = 0x20000, scoped, tag = 'input window, operand 9, single buffered']
    #allocation16 [shape = 's32[1]{0}', space=sflag, size = 0x4, scoped, tag = 'scoped memory for tpu_custom_call.1']
    #allocation17 [shape = 'u8[131072]{0}', space=vmem, size = 0x20000, scoped, tag = 'input window, operand 11, single buffered']
    #allocation18 [shape = 'u8[131072]{0}', space=vmem, size = 0x20000, scoped, tag = 'input window, operand 13, single buffered']
    #allocation19 [shape = 's32[1]{0}', space=sflag, size = 0x4, scoped, tag = 'scoped memory for tpu_custom_call.1']
    #allocation20 [shape = 'u8[65536]{0}', space=vmem, size = 0x10000, scoped, tag = 'output window, operand 0']
    #allocation21 [shape = 'u8[8192]{0}', space=vmem, size = 0x2000, scoped, tag = 'output window, operand 1']
    #allocation22 [shape = 's32[2]{0}', space=sflag, size = 0x8, scoped, tag = 'scoped memory for tpu_custom_call.1']
    %22 = vsyncpa [#allocation4], 0
    %s23 = scalar_lea.sflag [#allocation4], 1
    %24 = vsyncpa %s23, 0
    %25 = vsyncpa [#allocation7], 0
    %s26 = scalar_lea.sflag [#allocation7], 1
    %27 = vsyncpa %s26, 0
    %28 = vsyncpa [#allocation10], 0
    %s29 = scalar_lea.sflag [#allocation10], 1
    %30 = vsyncpa %s29, 0
    %31 = vsyncpa [#allocation13], 0
    %32 = vsyncpa [#allocation16], 0
    %33 = vsyncpa [#allocation19], 0
    %34 = vsyncpa [#allocation5], 0
    %s35 = scalar_lea.sflag [#allocation5], 1
    %36 = vsyncpa %s35, 0
    %37 = vsyncpa [#allocation22], 0
    %s38 = scalar_lea.sflag [#allocation22], 1
    %39 = vsyncpa %s38, 0
    loop: start=0, step=1, limit=6
    $region2: #{tpu_custom_call.1} parent=1 // loop_pre_header
      _
    $region3: #{tpu_custom_call.1} parent=1 // loop_header
      %s41 = sphi 0, %s45
      %p42 = scmp.ge.s32.totalorder %s41, 6
      %s48 = sphi 0, %s60
      %s49 = sphi 0, %s56
      %s50 = sphi 0, %s48
      %s51 = sphi 0, %s49
      %s52 = sphi 0, %s50
      %s53 = sphi 0, %s51
      %s65 = sphi 0, %s67
      %s68 = sphi 0, %s65
      %s69 = sphi 0, %s68
      %s85 = sphi 0, %s69
      %s91 = sphi 0, %s93
      %s94 = sphi 0, %s91
      %s95 = sphi 0, %s94
      %s111 = sphi 0, %s95
      %s117 = sphi 0, %s119
      %s120 = sphi 0, %s117
      %s121 = sphi 0, %s120
      %s137 = sphi 0, %s121
      %s143 = sphi 0, %s145
      %s146 = sphi 0, %s143
      %s147 = sphi 0, %s146
      %s163 = sphi 0, %s147
      %s167 = sphi 0, %s167
      %s169 = sphi 0, %s167
      %s170 = sphi 0, %s169
      %s184 = sphi 0, %s170
      %s188 = sphi 0, %s188
      %s190 = sphi 0, %s188
      %s191 = sphi 0, %s190
      %s205 = sphi 0, %s191
      %s209 = sphi 0, %s209
      %s211 = sphi 0, %s209
      %s212 = sphi 0, %s211
      %s226 = sphi 0, %s212
      %s230 = sphi 0, %s230
      %s232 = sphi 0, %s230
      %s233 = sphi 0, %s232
      %s247 = sphi 0, %s233
      %s251 = sphi 0, %s251
      %s253 = sphi 0, %s251
      %s254 = sphi 0, %s253
      %s268 = sphi 0, %s254
      %s272 = sphi 0, %s272
      %s274 = sphi 0, %s272
      %s275 = sphi 0, %s274
      %s289 = sphi 0, %s275
      %s293 = sphi 0, %s293
      %s295 = sphi 0, %s293
      %s296 = sphi 0, %s295
      %s310 = sphi 0, %s296
      %s314 = sphi 0, %s314
      %s316 = sphi 0, %s314
      %s317 = sphi 0, %s316
      %s331 = sphi 0, %s317
      %s335 = sphi 0, %s335
      %s337 = sphi 0, %s335
      %s338 = sphi 0, %s337
      %s352 = sphi 0, %s338
      %s356 = sphi 0, %s356
      %s358 = sphi 0, %s356
      %s359 = sphi 0, %s358
      %s373 = sphi 0, %s359
      %s377 = sphi 0, %s377
      %s379 = sphi 0, %s377
      %s380 = sphi 0, %s379
      %s394 = sphi 0, %s380
      %s400 = sphi 0, %s402
      %s403 = sphi 0, %s400
      %s404 = sphi 0, %s403
      %s420 = sphi 0, %s404
      %s426 = sphi 0, %s428
      %s429 = sphi 0, %s426
      %s430 = sphi 0, %s429
      %s446 = sphi 0, %s430
    $region4: #{tpu_custom_call.1} parent=1 // loop_header_branch
      %44 = sbr.rel (%p42) target = $region8
    $region5: #{tpu_custom_call.1} parent=1 // loop_body
      %s46 = ssub.s32 %s41, 1
      %s47 = ssub.s32 %s41, 2
      %s54 = sadd.s32 1, %s49
      %p55 = scmp.ge.s32.totalorder %s54, 2
      %s56 = scalar_select %p55, 0, %s54
      %s57 = sadd.s32 1, %s48
      %s58 = scalar_select %p55, %s57, %s48
      %p59 = scmp.ge.s32.totalorder %s58, 2
      %s60 = scalar_select %p59, 0, %s58
      %s61 = ssub.s32 %s48, %s60
      %s62 = ssub.s32 %s49, %s56
      %s63 = sor.u32 %s61, %s62
      %p64 = scmp.eq.s32.totalorder %s63, 0
      %s66 = sadd.s32 %s65, 1
      %s67 = scalar_select %p64, %s65, %s66
      %p70 = pneg %p64
      %p71 = scmp.eq.s32.totalorder %s41, 3
      %p72 = por %p70, %p71
      %p73 = scmp.ne.s32.totalorder %s65, %s68
      %p74 = scmp.eq.s32.totalorder %s41, 0
      %p75 = por %p73, %p74
      %p76 = scmp.ne.s32.totalorder %s65, %s68
      %p77 = scmp.eq.s32.totalorder %s46, 3
      %p78 = por %p76, %p77
      %p79 = scmp.ne.s32.totalorder %s68, %s69
      %p80 = scmp.eq.s32.totalorder %s46, 0
      %p81 = por %p79, %p80
      %p82 = scmp.ne.s32.totalorder %s68, %s69
      %p83 = scmp.eq.s32.totalorder %s47, 3
      %p84 = por %p82, %p83
      %p86 = scmp.ne.s32.totalorder %s69, %s85
      %p87 = scmp.eq.s32.totalorder %s47, 0
      %p88 = por %p86, %p87
      %s89 = ssub.s32 %s48, %s60
      %p90 = scmp.eq.s32.totalorder %s89, 0
      %s92 = sadd.s32 %s91, 1
      %s93 = scalar_select %p90, %s91, %s92
      %p96 = pneg %p90
      %p97 = scmp.eq.s32.totalorder %s41, 3
      %p98 = por %p96, %p97
      %p99 = scmp.ne.s32.totalorder %s91, %s94
      %p100 = scmp.eq.s32.totalorder %s41, 0
      %p101 = por %p99, %p100
      %p102 = scmp.ne.s32.totalorder %s91, %s94
      %p103 = scmp.eq.s32.totalorder %s46, 3
      %p104 = por %p102, %p103
      %p105 = scmp.ne.s32.totalorder %s94, %s95
      %p106 = scmp.eq.s32.totalorder %s46, 0
      %p107 = por %p105, %p106
      %p108 = scmp.ne.s32.totalorder %s94, %s95
      %p109 = scmp.eq.s32.totalorder %s47, 3
      %p110 = por %p108, %p109
      %p112 = scmp.ne.s32.totalorder %s95, %s111
      %p113 = scmp.eq.s32.totalorder %s47, 0
      %p114 = por %p112, %p113
      %s115 = ssub.s32 %s48, %s60
      %p116 = scmp.eq.s32.totalorder %s115, 0
      %s118 = sadd.s32 %s117, 1
      %s119 = scalar_select %p116, %s117, %s118
      %p122 = pneg %p116
      %p123 = scmp.eq.s32.totalorder %s41, 3
      %p124 = por %p122, %p123
      %p125 = scmp.ne.s32.totalorder %s117, %s120
      %p126 = scmp.eq.s32.totalorder %s41, 0
      %p127 = por %p125, %p126
      %p128 = scmp.ne.s32.totalorder %s117, %s120
      %p129 = scmp.eq.s32.totalorder %s46, 3
      %p130 = por %p128, %p129
      %p131 = scmp.ne.s32.totalorder %s120, %s121
      %p132 = scmp.eq.s32.totalorder %s46, 0
      %p133 = por %p131, %p132
      %p134 = scmp.ne.s32.totalorder %s120, %s121
      %p135 = scmp.eq.s32.totalorder %s47, 3
      %p136 = por %p134, %p135
      %p138 = scmp.ne.s32.totalorder %s121, %s137
      %p139 = scmp.eq.s32.totalorder %s47, 0
      %p140 = por %p138, %p139
      %s141 = ssub.s32 %s49, %s56
      %p142 = scmp.eq.s32.totalorder %s141, 0
      %s144 = sadd.s32 %s143, 1
      %s145 = scalar_select %p142, %s143, %s144
      %p148 = pneg %p142
      %p149 = scmp.eq.s32.totalorder %s41, 3
      %p150 = por %p148, %p149
      %p151 = scmp.ne.s32.totalorder %s143, %s146
      %p152 = scmp.eq.s32.totalorder %s41, 0
      %p153 = por %p151, %p152
      %p154 = scmp.ne.s32.totalorder %s143, %s146
      %p155 = scmp.eq.s32.totalorder %s46, 3
      %p156 = por %p154, %p155
      %p157 = scmp.ne.s32.totalorder %s146, %s147
      %p158 = scmp.eq.s32.totalorder %s46, 0
      %p159 = por %p157, %p158
      %p160 = scmp.ne.s32.totalorder %s146, %s147
      %p161 = scmp.eq.s32.totalorder %s47, 3
      %p162 = por %p160, %p161
      %p164 = scmp.ne.s32.totalorder %s147, %s163
      %p165 = scmp.eq.s32.totalorder %s47, 0
      %p166 = por %p164, %p165
      %s168 = sadd.s32 %s167, 1
      %p171 = scmp.eq.s32.totalorder %s41, 3
      %p172 = scmp.ne.s32.totalorder %s167, %s169
      %p173 = scmp.eq.s32.totalorder %s41, 0
      %p174 = por %p172, %p173
      %p175 = scmp.ne.s32.totalorder %s167, %s169
      %p176 = scmp.eq.s32.totalorder %s46, 3
      %p177 = por %p175, %p176
      %p178 = scmp.ne.s32.totalorder %s169, %s170
      %p179 = scmp.eq.s32.totalorder %s46, 0
      %p180 = por %p178, %p179
      %p181 = scmp.ne.s32.totalorder %s169, %s170
      %p182 = scmp.eq.s32.totalorder %s47, 3
      %p183 = por %p181, %p182
      %p185 = scmp.ne.s32.totalorder %s170, %s184
      %p186 = scmp.eq.s32.totalorder %s47, 0
      %p187 = por %p185, %p186
      %s189 = sadd.s32 %s188, 1
      %p192 = scmp.eq.s32.totalorder %s41, 3
      %p193 = scmp.ne.s32.totalorder %s188, %s190
      %p194 = scmp.eq.s32.totalorder %s41, 0
      %p195 = por %p193, %p194
      %p196 = scmp.ne.s32.totalorder %s188, %s190
      %p197 = scmp.eq.s32.totalorder %s46, 3
      %p198 = por %p196, %p197
      %p199 = scmp.ne.s32.totalorder %s190, %s191
      %p200 = scmp.eq.s32.totalorder %s46, 0
      %p201 = por %p199, %p200
      %p202 = scmp.ne.s32.totalorder %s190, %s191
      %p203 = scmp.eq.s32.totalorder %s47, 3
      %p204 = por %p202, %p203
      %p206 = scmp.ne.s32.totalorder %s191, %s205
      %p207 = scmp.eq.s32.totalorder %s47, 0
      %p208 = por %p206, %p207
      %s210 = sadd.s32 %s209, 1
      %p213 = scmp.eq.s32.totalorder %s41, 3
      %p214 = scmp.ne.s32.totalorder %s209, %s211
      %p215 = scmp.eq.s32.totalorder %s41, 0
      %p216 = por %p214, %p215
      %p217 = scmp.ne.s32.totalorder %s209, %s211
      %p218 = scmp.eq.s32.totalorder %s46, 3
      %p219 = por %p217, %p218
      %p220 = scmp.ne.s32.totalorder %s211, %s212
      %p221 = scmp.eq.s32.totalorder %s46, 0
      %p222 = por %p220, %p221
      %p223 = scmp.ne.s32.totalorder %s211, %s212
      %p224 = scmp.eq.s32.totalorder %s47, 3
      %p225 = por %p223, %p224
      %p227 = scmp.ne.s32.totalorder %s212, %s226
      %p228 = scmp.eq.s32.totalorder %s47, 0
      %p229 = por %p227, %p228
      %s231 = sadd.s32 %s230, 1
      %p234 = scmp.eq.s32.totalorder %s41, 3
      %p235 = scmp.ne.s32.totalorder %s230, %s232
      %p236 = scmp.eq.s32.totalorder %s41, 0
      %p237 = por %p235, %p236
      %p238 = scmp.ne.s32.totalorder %s230, %s232
      %p239 = scmp.eq.s32.totalorder %s46, 3
      %p240 = por %p238, %p239
      %p241 = scmp.ne.s32.totalorder %s232, %s233
      %p242 = scmp.eq.s32.totalorder %s46, 0
      %p243 = por %p241, %p242
      %p244 = scmp.ne.s32.totalorder %s232, %s233
      %p245 = scmp.eq.s32.totalorder %s47, 3
      %p246 = por %p244, %p245
      %p248 = scmp.ne.s32.totalorder %s233, %s247
      %p249 = scmp.eq.s32.totalorder %s47, 0
      %p250 = por %p248, %p249
      %s252 = sadd.s32 %s251, 1
      %p255 = scmp.eq.s32.totalorder %s41, 3
      %p256 = scmp.ne.s32.totalorder %s251, %s253
      %p257 = scmp.eq.s32.totalorder %s41, 0
      %p258 = por %p256, %p257
      %p259 = scmp.ne.s32.totalorder %s251, %s253
      %p260 = scmp.eq.s32.totalorder %s46, 3
      %p261 = por %p259, %p260
      %p262 = scmp.ne.s32.totalorder %s253, %s254
      %p263 = scmp.eq.s32.totalorder %s46, 0
      %p264 = por %p262, %p263
      %p265 = scmp.ne.s32.totalorder %s253, %s254
      %p266 = scmp.eq.s32.totalorder %s47, 3
      %p267 = por %p265, %p266
      %p269 = scmp.ne.s32.totalorder %s254, %s268
      %p270 = scmp.eq.s32.totalorder %s47, 0
      %p271 = por %p269, %p270
      %s273 = sadd.s32 %s272, 1
      %p276 = scmp.eq.s32.totalorder %s41, 3
      %p277 = scmp.ne.s32.totalorder %s272, %s274
      %p278 = scmp.eq.s32.totalorder %s41, 0
      %p279 = por %p277, %p278
      %p280 = scmp.ne.s32.totalorder %s272, %s274
      %p281 = scmp.eq.s32.totalorder %s46, 3
      %p282 = por %p280, %p281
      %p283 = scmp.ne.s32.totalorder %s274, %s275
      %p284 = scmp.eq.s32.totalorder %s46, 0
      %p285 = por %p283, %p284
      %p286 = scmp.ne.s32.totalorder %s274, %s275
      %p287 = scmp.eq.s32.totalorder %s47, 3
      %p288 = por %p286, %p287
      %p290 = scmp.ne.s32.totalorder %s275, %s289
      %p291 = scmp.eq.s32.totalorder %s47, 0
      %p292 = por %p290, %p291
      %s294 = sadd.s32 %s293, 1
      %p297 = scmp.eq.s32.totalorder %s41, 3
      %p298 = scmp.ne.s32.totalorder %s293, %s295
      %p299 = scmp.eq.s32.totalorder %s41, 0
      %p300 = por %p298, %p299
      %p301 = scmp.ne.s32.totalorder %s293, %s295
      %p302 = scmp.eq.s32.totalorder %s46, 3
      %p303 = por %p301, %p302
      %p304 = scmp.ne.s32.totalorder %s295, %s296
      %p305 = scmp.eq.s32.totalorder %s46, 0
      %p306 = por %p304, %p305
      %p307 = scmp.ne.s32.totalorder %s295, %s296
      %p308 = scmp.eq.s32.totalorder %s47, 3
      %p309 = por %p307, %p308
      %p311 = scmp.ne.s32.totalorder %s296, %s310
      %p312 = scmp.eq.s32.totalorder %s47, 0
      %p313 = por %p311, %p312
      %s315 = sadd.s32 %s314, 1
      %p318 = scmp.eq.s32.totalorder %s41, 3
      %p319 = scmp.ne.s32.totalorder %s314, %s316
      %p320 = scmp.eq.s32.totalorder %s41, 0
      %p321 = por %p319, %p320
      %p322 = scmp.ne.s32.totalorder %s314, %s316
      %p323 = scmp.eq.s32.totalorder %s46, 3
      %p324 = por %p322, %p323
      %p325 = scmp.ne.s32.totalorder %s316, %s317
      %p326 = scmp.eq.s32.totalorder %s46, 0
      %p327 = por %p325, %p326
      %p328 = scmp.ne.s32.totalorder %s316, %s317
      %p329 = scmp.eq.s32.totalorder %s47, 3
      %p330 = por %p328, %p329
      %p332 = scmp.ne.s32.totalorder %s317, %s331
      %p333 = scmp.eq.s32.totalorder %s47, 0
      %p334 = por %p332, %p333
      %s336 = sadd.s32 %s335, 1
      %p339 = scmp.eq.s32.totalorder %s41, 3
      %p340 = scmp.ne.s32.totalorder %s335, %s337
      %p341 = scmp.eq.s32.totalorder %s41, 0
      %p342 = por %p340, %p341
      %p343 = scmp.ne.s32.totalorder %s335, %s337
      %p344 = scmp.eq.s32.totalorder %s46, 3
      %p345 = por %p343, %p344
      %p346 = scmp.ne.s32.totalorder %s337, %s338
      %p347 = scmp.eq.s32.totalorder %s46, 0
      %p348 = por %p346, %p347
      %p349 = scmp.ne.s32.totalorder %s337, %s338
      %p350 = scmp.eq.s32.totalorder %s47, 3
      %p351 = por %p349, %p350
      %p353 = scmp.ne.s32.totalorder %s338, %s352
      %p354 = scmp.eq.s32.totalorder %s47, 0
      %p355 = por %p353, %p354
      %s357 = sadd.s32 %s356, 1
      %p360 = scmp.eq.s32.totalorder %s41, 3
      %p361 = scmp.ne.s32.totalorder %s356, %s358
      %p362 = scmp.eq.s32.totalorder %s41, 0
      %p363 = por %p361, %p362
      %p364 = scmp.ne.s32.totalorder %s356, %s358
      %p365 = scmp.eq.s32.totalorder %s46, 3
      %p366 = por %p364, %p365
      %p367 = scmp.ne.s32.totalorder %s358, %s359
      %p368 = scmp.eq.s32.totalorder %s46, 0
      %p369 = por %p367, %p368
      %p370 = scmp.ne.s32.totalorder %s358, %s359
      %p371 = scmp.eq.s32.totalorder %s47, 3
      %p372 = por %p370, %p371
      %p374 = scmp.ne.s32.totalorder %s359, %s373
      %p375 = scmp.eq.s32.totalorder %s47, 0
      %p376 = por %p374, %p375
      %s378 = sadd.s32 %s377, 1
      %p381 = scmp.eq.s32.totalorder %s41, 3
      %p382 = scmp.ne.s32.totalorder %s377, %s379
      %p383 = scmp.eq.s32.totalorder %s41, 0
      %p384 = por %p382, %p383
      %p385 = scmp.ne.s32.totalorder %s377, %s379
      %p386 = scmp.eq.s32.totalorder %s46, 3
      %p387 = por %p385, %p386
      %p388 = scmp.ne.s32.totalorder %s379, %s380
      %p389 = scmp.eq.s32.totalorder %s46, 0
      %p390 = por %p388, %p389
      %p391 = scmp.ne.s32.totalorder %s379, %s380
      %p392 = scmp.eq.s32.totalorder %s47, 3
      %p393 = por %p391, %p392
      %p395 = scmp.ne.s32.totalorder %s380, %s394
      %p396 = scmp.eq.s32.totalorder %s47, 0
      %p397 = por %p395, %p396
      %s398 = ssub.s32 %s48, %s60
      %p399 = scmp.eq.s32.totalorder %s398, 0
      %s401 = sadd.s32 %s400, 1
      %s402 = scalar_select %p399, %s400, %s401
      %p405 = pneg %p399
      %p406 = scmp.eq.s32.totalorder %s41, 3
      %p407 = por %p405, %p406
      %p408 = scmp.ne.s32.totalorder %s400, %s403
      %p409 = scmp.eq.s32.totalorder %s41, 0
      %p410 = por %p408, %p409
      %p411 = scmp.ne.s32.totalorder %s400, %s403
      %p412 = scmp.eq.s32.totalorder %s46, 3
      %p413 = por %p411, %p412
      %p414 = scmp.ne.s32.totalorder %s403, %s404
      %p415 = scmp.eq.s32.totalorder %s46, 0
      %p416 = por %p414, %p415
      %p417 = scmp.ne.s32.totalorder %s403, %s404
      %p418 = scmp.eq.s32.totalorder %s47, 3
      %p419 = por %p417, %p418
      %p421 = scmp.ne.s32.totalorder %s404, %s420
      %p422 = scmp.eq.s32.totalorder %s47, 0
      %p423 = por %p421, %p422
      %s424 = ssub.s32 %s48, %s60
      %p425 = scmp.eq.s32.totalorder %s424, 0
      %s427 = sadd.s32 %s426, 1
      %s428 = scalar_select %p425, %s426, %s427
      %p431 = pneg %p425
      %p432 = scmp.eq.s32.totalorder %s41, 3
      %p433 = por %p431, %p432
      %p434 = scmp.ne.s32.totalorder %s426, %s429
      %p435 = scmp.eq.s32.totalorder %s41, 0
      %p436 = por %p434, %p435
      %p437 = scmp.ne.s32.totalorder %s426, %s429
      %p438 = scmp.eq.s32.totalorder %s46, 3
      %p439 = por %p437, %p438
      %p440 = scmp.ne.s32.totalorder %s429, %s430
      %p441 = scmp.eq.s32.totalorder %s46, 0
      %p442 = por %p440, %p441
      %p443 = scmp.ne.s32.totalorder %s429, %s430
      %p444 = scmp.eq.s32.totalorder %s47, 3
      %p445 = por %p443, %p444
      %p447 = scmp.ne.s32.totalorder %s430, %s446
      %p448 = scmp.eq.s32.totalorder %s47, 0
      %p449 = por %p447, %p448
      %p450 = scmp.le.s32.totalorder 1, %s41
      %p451 = scmp.lt.s32.totalorder %s41, 5
      %p452 = pnand %p450, %p451
      %p453 = pneg %p452
      // Predicated region
      $region9: #{tpu_custom_call.1} parent=5 // pred_check
        _
      $region10: #{tpu_custom_call.1} parent=5 // pred_check_branch
        %455 = sbr.rel (%p452) target = $region12
      $region11: #{tpu_custom_call.1} parent=5 // pred_region
        %s456 = ssub.s32 %s41, 1
        // Predicated region
        $region13: #{tpu_custom_call.1} parent=11 // pred_check
          %p457 = pneg %p180
        $region14: #{tpu_custom_call.1} parent=11 // pred_check_branch
          %459 = sbr.rel (%p457) target = $region16
        $region15: #{tpu_custom_call.1} parent=11 // pred_region
          _
        $region16: #{tpu_custom_call.1} parent=11 // pred_fallthru
          _
        // Predicated region
        $region17: #{tpu_custom_call.1} parent=11 // pred_check
          %p460 = pneg %p201
        $region18: #{tpu_custom_call.1} parent=11 // pred_check_branch
          %462 = sbr.rel (%p460) target = $region20
        $region19: #{tpu_custom_call.1} parent=11 // pred_region
          %s464 = ssub.s32 2048, 2048
          %465 = vsyncadd [#allocation10], %s464
          %s466 = sshll.u32 [#allocation11], 4
          %s467 = int_to_ptr.vmem [resolvable:$true] %s466
          %472 = dma.hbm_to_vmem [thread:$0]  %s5, 2048, %s467, [#allocation10], 128, 128, 8
        $region20: #{tpu_custom_call.1} parent=11 // pred_fallthru
          _
        // Predicated region
        $region21: #{tpu_custom_call.1} parent=11 // pred_check
          %p473 = pneg %p222
        $region22: #{tpu_custom_call.1} parent=11 // pred_check_branch
          %475 = sbr.rel (%p473) target = $region24
        $region23: #{tpu_custom_call.1} parent=11 // pred_region
          %s477 = ssub.s32 16, 16
          %478 = vsyncadd [#allocation13], %s477
          %s480 = sshll.u32 [#allocation12], 4
          %s481 = int_to_ptr.vmem [resolvable:$true] %s480
          %483 = dma.hbm_to_vmem [thread:$0]  %s6, 16, %s481, [#allocation13]
        $region24: #{tpu_custom_call.1} parent=11 // pred_fallthru
          _
        // Predicated region
        $region25: #{tpu_custom_call.1} parent=11 // pred_check
          %p484 = pneg %p243
        $region26: #{tpu_custom_call.1} parent=11 // pred_check_branch
          %486 = sbr.rel (%p484) target = $region28
        $region27: #{tpu_custom_call.1} parent=11 // pred_region
          %s488 = ssub.s32 2048, 2048
          %489 = vsyncadd [#allocation13], %s488
          %s490 = sshll.u32 [#allocation14], 4
          %s491 = int_to_ptr.vmem [resolvable:$true] %s490
          %496 = dma.hbm_to_vmem [thread:$0]  %s7, 2048, %s491, [#allocation13], 128, 128, 8
        $region28: #{tpu_custom_call.1} parent=11 // pred_fallthru
          _
        // Predicated region
        $region29: #{tpu_custom_call.1} parent=11 // pred_check
          %p497 = pneg %p264
        $region30: #{tpu_custom_call.1} parent=11 // pred_check_branch
          %499 = sbr.rel (%p497) target = $region32
        $region31: #{tpu_custom_call.1} parent=11 // pred_region
          _
        $region32: #{tpu_custom_call.1} parent=11 // pred_fallthru
          _
        // Predicated region
        $region33: #{tpu_custom_call.1} parent=11 // pred_check
          %p500 = pneg %p285
        $region34: #{tpu_custom_call.1} parent=11 // pred_check_branch
          %502 = sbr.rel (%p500) target = $region36
        $region35: #{tpu_custom_call.1} parent=11 // pred_region
          %s504 = ssub.s32 4096, 4096
          %505 = vsyncadd [#allocation16], %s504
          %s506 = sshll.u32 [#allocation15], 4
          %s507 = int_to_ptr.vmem [resolvable:$true] %s506
          %512 = dma.hbm_to_vmem [thread:$0]  %s9, 4096, %s507, [#allocation16], 256, 256, 16
        $region36: #{tpu_custom_call.1} parent=11 // pred_fallthru
          _
        // Predicated region
        $region37: #{tpu_custom_call.1} parent=11 // pred_check
          %p513 = pneg %p306
        $region38: #{tpu_custom_call.1} parent=11 // pred_check_branch
          %515 = sbr.rel (%p513) target = $region40
        $region39: #{tpu_custom_call.1} parent=11 // pred_region
          _
        $region40: #{tpu_custom_call.1} parent=11 // pred_fallthru
          _
        // Predicated region
        $region41: #{tpu_custom_call.1} parent=11 // pred_check
          %p516 = pneg %p327
        $region42: #{tpu_custom_call.1} parent=11 // pred_check_branch
          %518 = sbr.rel (%p516) target = $region44
        $region43: #{tpu_custom_call.1} parent=11 // pred_region
          %s520 = ssub.s32 4096, 4096
          %521 = vsyncadd [#allocation16], %s520
          %s522 = sshll.u32 [#allocation17], 4
          %s523 = int_to_ptr.vmem [resolvable:$true] %s522
          %528 = dma.hbm_to_vmem [thread:$0]  %s11, 4096, %s523, [#allocation16], 256, 256, 16
        $region44: #{tpu_custom_call.1} parent=11 // pred_fallthru
          _
        // Predicated region
        $region45: #{tpu_custom_call.1} parent=11 // pred_check
          %p529 = pneg %p348
        $region46: #{tpu_custom_call.1} parent=11 // pred_check_branch
          %531 = sbr.rel (%p529) target = $region48
        $region47: #{tpu_custom_call.1} parent=11 // pred_region
          _
        $region48: #{tpu_custom_call.1} parent=11 // pred_fallthru
          _
        // Predicated region
        $region49: #{tpu_custom_call.1} parent=11 // pred_check
          %p532 = pneg %p369
        $region50: #{tpu_custom_call.1} parent=11 // pred_check_branch
          %534 = sbr.rel (%p532) target = $region52
        $region51: #{tpu_custom_call.1} parent=11 // pred_region
          %s536 = ssub.s32 4096, 4096
          %537 = vsyncadd [#allocation19], %s536
          %s538 = sshll.u32 [#allocation18], 4
          %s539 = int_to_ptr.vmem [resolvable:$true] %s538
          %544 = dma.hbm_to_vmem [thread:$0]  %s13, 4096, %s539, [#allocation19], 256, 256, 16
        $region52: #{tpu_custom_call.1} parent=11 // pred_fallthru
          _
        // Predicated region
        $region53: #{tpu_custom_call.1} parent=11 // pred_check
          %p545 = pneg %p390
        $region54: #{tpu_custom_call.1} parent=11 // pred_check_branch
          %547 = sbr.rel (%p545) target = $region56
        $region55: #{tpu_custom_call.1} parent=11 // pred_region
          _
        $region56: #{tpu_custom_call.1} parent=11 // pred_fallthru
          _
      $region12: #{tpu_custom_call.1} parent=5 // pred_fallthru
        _
      %p548 = scmp.lt.s32.totalorder %s41, 4
      // Predicated region
      $region57: #{tpu_custom_call.1} parent=5 // pred_check
        %p549 = pneg %p548
      $region58: #{tpu_custom_call.1} parent=5 // pred_check_branch
        %551 = sbr.rel (%p549) target = $region60
      $region59: #{tpu_custom_call.1} parent=5 // pred_region
        // Predicated region
        $region61: #{tpu_custom_call.1} parent=59 // pred_check
          %p552 = pneg %p75
        $region62: #{tpu_custom_call.1} parent=59 // pred_check_branch
          %554 = sbr.rel (%p552) target = $region64
        $region63: #{tpu_custom_call.1} parent=59 // pred_region
          %s555 = sand.u32 %s65, 1
          %s556 = scalar_lea.sflag [#allocation4], %s555
          %s557 = sand.u32 %s65, 1
          %s558 = smul.addr %s557, 8
          %s559 = scalar_lea.vmem [#allocation3], %s558
          %s561 = ssub.s32 128, 128
          %562 = vsyncadd %s556, %s561
          %s563 = smul.addr %s48, 2
          %s564 = sadd.s32 %s49, %s563
          %s565 = smul.addr %s564, 128
          %s566 = scalar_lea.hbm %s0, %s565
          %s568 = sshll.u32 %s559, 4
          %s569 = int_to_ptr.vmem [resolvable:$true] %s568
          %571 = dma.hbm_to_vmem [thread:$0]  %s566, 128, %s569, %s556
        $region64: #{tpu_custom_call.1} parent=59 // pred_fallthru
          _
        // Predicated region
        $region65: #{tpu_custom_call.1} parent=59 // pred_check
          %p572 = pneg %p101
        $region66: #{tpu_custom_call.1} parent=59 // pred_check_branch
          %574 = sbr.rel (%p572) target = $region68
        $region67: #{tpu_custom_call.1} parent=59 // pred_region
          %s575 = sand.u32 %s41, 1
          %s576 = scalar_lea.sflag [#allocation7], %s575
          %s577 = sand.u32 %s91, 1
          %s578 = smul.addr %s577, 32
          %s579 = scalar_lea.vmem [#allocation6], %s578
          %s581 = ssub.s32 512, 512
          %582 = vsyncadd %s576, %s581
          %s583 = smul.addr %s48, 128
          %s584 = scalar_lea.hbm %s1, %s583
          %s585 = sshll.u32 %s579, 4
          %s586 = int_to_ptr.vmem [resolvable:$true] %s585
          %591 = dma.hbm_to_vmem [thread:$0]  %s584, 512, %s586, %s576, 256, 128, 8
        $region68: #{tpu_custom_call.1} parent=59 // pred_fallthru
          _
        // Predicated region
        $region69: #{tpu_custom_call.1} parent=59 // pred_check
          %p592 = pneg %p127
        $region70: #{tpu_custom_call.1} parent=59 // pred_check_branch
          %594 = sbr.rel (%p592) target = $region72
        $region71: #{tpu_custom_call.1} parent=59 // pred_region
          %s595 = sand.u32 %s41, 1
          %s596 = scalar_lea.sflag [#allocation7], %s595
          %s597 = sand.u32 %s117, 1
          %s598 = smul.addr %s597, 8
          %s599 = scalar_lea.vmem [#allocation8], %s598
          %s601 = ssub.s32 128, 128
          %602 = vsyncadd %s596, %s601
          %s603 = smul.addr %s48, 128
          %s604 = scalar_lea.hbm %s2, %s603
          %s606 = sshll.u32 %s599, 4
          %s607 = int_to_ptr.vmem [resolvable:$true] %s606
          %609 = dma.hbm_to_vmem [thread:$0]  %s604, 128, %s607, %s596
        $region72: #{tpu_custom_call.1} parent=59 // pred_fallthru
          _
        // Predicated region
        $region73: #{tpu_custom_call.1} parent=59 // pred_check
          %p610 = pneg %p153
        $region74: #{tpu_custom_call.1} parent=59 // pred_check_branch
          %612 = sbr.rel (%p610) target = $region76
        $region75: #{tpu_custom_call.1} parent=59 // pred_region
          %s613 = sand.u32 %s41, 1
          %s614 = scalar_lea.sflag [#allocation10], %s613
          %s615 = sand.u32 %s143, 1
          %s616 = smul.addr %s615, 256
          %s617 = scalar_lea.vmem [#allocation9], %s616
          %s618 = smul.u32 16, %s49
          %s620 = ssub.s32 4096, 4096
          %621 = vsyncadd %s614, %s620
          %s622 = smul.addr %s618, 4
          %s623 = smul.addr %s622, 64
          %s624 = scalar_lea.hbm %s3, %s623
          %s625 = sshll.u32 %s617, 4
          %s626 = int_to_ptr.vmem [resolvable:$true] %s625
          %631 = dma.hbm_to_vmem [thread:$0]  %s624, 4096, %s626, %s614, 256, 256, 16
        $region76: #{tpu_custom_call.1} parent=59 // pred_fallthru
          _
      $region60: #{tpu_custom_call.1} parent=5 // pred_fallthru
        _
      %p632 = scmp.le.s32.totalorder 1, %s41
      %p633 = scmp.lt.s32.totalorder %s41, 5
      %p634 = pnand %p632, %p633
      %p635 = pneg %p634
      // Predicated region
      $region77: #{tpu_custom_call.1} parent=5 // pred_check
        _
      $region78: #{tpu_custom_call.1} parent=5 // pred_check_branch
        %637 = sbr.rel (%p634) target = $region80
      $region79: #{tpu_custom_call.1} parent=5 // pred_region
        %s638 = ssub.s32 %s41, 1
        %s639 = sand.u32 %s68, 1
        %s640 = scalar_lea.sflag [#allocation4], %s639
        %s641 = sand.u32 %s68, 1
        %s642 = smul.addr %s641, 8
        %s643 = scalar_lea.vmem [#allocation3], %s642
        // Predicated region
        $region81: #{tpu_custom_call.1} parent=79 // pred_check
          %p644 = pneg %p81
        $region82: #{tpu_custom_call.1} parent=79 // pred_check_branch
          %646 = sbr.rel (%p644) target = $region84
        $region83: #{tpu_custom_call.1} parent=79 // pred_region
          %647 = dma.done %s640, 128
        $region84: #{tpu_custom_call.1} parent=79 // pred_fallthru
          _
        %s648 = sand.u32 %s46, 1
        %s649 = scalar_lea.sflag [#allocation7], %s648
        %s650 = sand.u32 %s94, 1
        %s651 = smul.addr %s650, 32
        %s652 = scalar_lea.vmem [#allocation6], %s651
        // Predicated region
        $region85: #{tpu_custom_call.1} parent=79 // pred_check
          %p653 = pneg %p107
        $region86: #{tpu_custom_call.1} parent=79 // pred_check_branch
          %655 = sbr.rel (%p653) target = $region88
        $region87: #{tpu_custom_call.1} parent=79 // pred_region
          %656 = dma.done %s649, 512
        $region88: #{tpu_custom_call.1} parent=79 // pred_fallthru
          _
        %s657 = sand.u32 %s46, 1
        %s658 = scalar_lea.sflag [#allocation7], %s657
        %s659 = sand.u32 %s120, 1
        %s660 = smul.addr %s659, 8
        %s661 = scalar_lea.vmem [#allocation8], %s660
        // Predicated region
        $region89: #{tpu_custom_call.1} parent=79 // pred_check
          %p662 = pneg %p133
        $region90: #{tpu_custom_call.1} parent=79 // pred_check_branch
          %664 = sbr.rel (%p662) target = $region92
        $region91: #{tpu_custom_call.1} parent=79 // pred_region
          %665 = dma.done %s658, 128
        $region92: #{tpu_custom_call.1} parent=79 // pred_fallthru
          _
        %s666 = sand.u32 %s46, 1
        %s667 = scalar_lea.sflag [#allocation10], %s666
        %s668 = sand.u32 %s146, 1
        %s669 = smul.addr %s668, 256
        %s670 = scalar_lea.vmem [#allocation9], %s669
        // Predicated region
        $region93: #{tpu_custom_call.1} parent=79 // pred_check
          %p671 = pneg %p159
        $region94: #{tpu_custom_call.1} parent=79 // pred_check_branch
          %673 = sbr.rel (%p671) target = $region96
        $region95: #{tpu_custom_call.1} parent=79 // pred_region
          %674 = dma.done %s667, 4096
        $region96: #{tpu_custom_call.1} parent=79 // pred_fallthru
          _
        // Predicated region
        $region97: #{tpu_custom_call.1} parent=79 // pred_check
          %p675 = pneg %p201
        $region98: #{tpu_custom_call.1} parent=79 // pred_check_branch
          %677 = sbr.rel (%p675) target = $region100
        $region99: #{tpu_custom_call.1} parent=79 // pred_region
          %678 = dma.done [#allocation10], 2048
        $region100: #{tpu_custom_call.1} parent=79 // pred_fallthru
          _
        // Predicated region
        $region101: #{tpu_custom_call.1} parent=79 // pred_check
          %p679 = pneg %p222
        $region102: #{tpu_custom_call.1} parent=79 // pred_check_branch
          %681 = sbr.rel (%p679) target = $region104
        $region103: #{tpu_custom_call.1} parent=79 // pred_region
          %682 = dma.done [#allocation13], 16
        $region104: #{tpu_custom_call.1} parent=79 // pred_fallthru
          _
        // Predicated region
        $region105: #{tpu_custom_call.1} parent=79 // pred_check
          %p683 = pneg %p243
        $region106: #{tpu_custom_call.1} parent=79 // pred_check_branch
          %685 = sbr.rel (%p683) target = $region108
        $region107: #{tpu_custom_call.1} parent=79 // pred_region
          %686 = dma.done [#allocation13], 2048
        $region108: #{tpu_custom_call.1} parent=79 // pred_fallthru
          _
        // Predicated region
        $region109: #{tpu_custom_call.1} parent=79 // pred_check
          %p687 = pneg %p285
        $region110: #{tpu_custom_call.1} parent=79 // pred_check_branch
          %689 = sbr.rel (%p687) target = $region112
        $region111: #{tpu_custom_call.1} parent=79 // pred_region
          %690 = dma.done [#allocation16], 4096
        $region112: #{tpu_custom_call.1} parent=79 // pred_fallthru
          _
        // Predicated region
        $region113: #{tpu_custom_call.1} parent=79 // pred_check
          %p691 = pneg %p327
        $region114: #{tpu_custom_call.1} parent=79 // pred_check_branch
          %693 = sbr.rel (%p691) target = $region116
        $region115: #{tpu_custom_call.1} parent=79 // pred_region
          %694 = dma.done [#allocation16], 4096
        $region116: #{tpu_custom_call.1} parent=79 // pred_fallthru
          _
        // Predicated region
        $region117: #{tpu_custom_call.1} parent=79 // pred_check
          %p695 = pneg %p369
        $region118: #{tpu_custom_call.1} parent=79 // pred_check_branch
          %697 = sbr.rel (%p695) target = $region120
        $region119: #{tpu_custom_call.1} parent=79 // pred_region
          %698 = dma.done [#allocation19], 4096
        $region120: #{tpu_custom_call.1} parent=79 // pred_fallthru
          _
        %s699 = sand.u32 %s68, 1
        %s700 = scalar_lea.sflag [#allocation4], %s699
        %s701 = sand.u32 %s68, 1
        %s702 = smul.addr %s701, 8
        %s703 = scalar_lea.vmem [#allocation3], %s702
        %p704 = pneg %p81
        %p705 = pneg %p78
        %s706 = sand.u32 %s46, 1
        %s707 = scalar_lea.sflag [#allocation7], %s706
        %s708 = sand.u32 %s94, 1
        %s709 = smul.addr %s708, 32
        %s710 = scalar_lea.vmem [#allocation6], %s709
        %p711 = pneg %p107
        %p712 = pneg %p104
        %s713 = sand.u32 %s46, 1
        %s714 = scalar_lea.sflag [#allocation7], %s713
        %s715 = sand.u32 %s120, 1
        %s716 = smul.addr %s715, 8
        %s717 = scalar_lea.vmem [#allocation8], %s716
        %p718 = pneg %p133
        %p719 = pneg %p130
        %s720 = sand.u32 %s46, 1
        %s721 = scalar_lea.sflag [#allocation10], %s720
        %s722 = sand.u32 %s146, 1
        %s723 = smul.addr %s722, 256
        %s724 = scalar_lea.vmem [#allocation9], %s723
        %p725 = pneg %p159
        %p726 = pneg %p156
        %p727 = pneg %p180
        %p728 = pneg %p177
        %p729 = pneg %p201
        %p730 = pneg %p198
        %p731 = pneg %p222
        %p732 = pneg %p219
        %p733 = pneg %p243
        %p734 = pneg %p240
        %p735 = pneg %p264
        %p736 = pneg %p261
        %p737 = pneg %p285
        %p738 = pneg %p282
        %p739 = pneg %p306
        %p740 = pneg %p303
        %p741 = pneg %p327
        %p742 = pneg %p324
        %p743 = pneg %p348
        %p744 = pneg %p345
        %p745 = pneg %p369
        %p746 = pneg %p366
        %p747 = pneg %p390
        %p748 = pneg %p387
        %p749 = pneg %p416
        %p750 = pneg %p413
        %s751 = sand.u32 %s403, 1
        %s752 = scalar_lea.sflag [#allocation5], %s751
        %s753 = sand.u32 %s403, 1
        %s754 = smul.addr %s753, 64
        %s755 = scalar_lea.vmem [#allocation20], %s754
        %p756 = pneg %p442
        %p757 = pneg %p439
        %s758 = sand.u32 %s429, 1
        %s759 = scalar_lea.sflag [#allocation22], %s758
        %s760 = sand.u32 %s429, 1
        %s761 = smul.addr %s760, 8
        %s762 = scalar_lea.vmem [#allocation21], %s761
        %s763 = smul.u32 16, %s51
        %p765 = scmp.eq.s32.totalorder %s51, 0
        // Predicated region
        $region121: #{tpu_custom_call.1} parent=79 // pred_check
          %p766 = pneg %p765
        $region122: #{tpu_custom_call.1} parent=79 // pred_check_branch
          %768 = sbr.rel (%p766) target = $region124
        $region123: #{tpu_custom_call.1} parent=79 // pred_region
          %769 = vst [vmem:[#allocation2] sm:$0xff] 0.0
          %770 = vst [vmem:[#allocation2 + $0x8] sm:$0xff] 0.0
          %771 = vst [vmem:[#allocation2 + $0x10] sm:$0xff] 0.0
          %772 = vst [vmem:[#allocation2 + $0x18] sm:$0xff] 0.0
        $region124: #{tpu_custom_call.1} parent=79 // pred_fallthru
          _
        %v773 = vld [vmem:[#allocation2] sm:$0xff]
        %v774 = vld [vmem:[#allocation2 + $0x8] sm:$0xff]
        %v775 = vld [vmem:[#allocation2 + $0x10] sm:$0xff]
        %v776 = vld [vmem:[#allocation2 + $0x18] sm:$0xff]
        %v777 = vld [vmem:[%s643] sm:$0xff]
        %v778 = vpack.c.bf16 %v777, %v777
        %v779 = vld [vmem:[%s670] sm:$0xff]
        %v780 = vld [vmem:[%s670 + $0x8] sm:$0xff]
        %v781 = vld [vmem:[%s670 + $0x10] sm:$0xff]
        %v782 = vld [vmem:[%s670 + $0x18] sm:$0xff]
        %v783 = vld [vmem:[%s670 + $0x20] sm:$0xff]
        %v784 = vld [vmem:[%s670 + $0x28] sm:$0xff]
        %v785 = vld [vmem:[%s670 + $0x30] sm:$0xff]
        %v786 = vld [vmem:[%s670 + $0x38] sm:$0xff]
        %v787 = vld [vmem:[%s670 + $0x40] sm:$0xff]
        %v788 = vld [vmem:[%s670 + $0x48] sm:$0xff]
        %v789 = vld [vmem:[%s670 + $0x50] sm:$0xff]
        %v790 = vld [vmem:[%s670 + $0x58] sm:$0xff]
        %v791 = vld [vmem:[%s670 + $0x60] sm:$0xff]
        %v792 = vld [vmem:[%s670 + $0x68] sm:$0xff]
        %v793 = vld [vmem:[%s670 + $0x70] sm:$0xff]
        %v794 = vld [vmem:[%s670 + $0x78] sm:$0xff]
        %v795 = vld [vmem:[%s670 + $0x80] sm:$0xff]
        %v796 = vld [vmem:[%s670 + $0x88] sm:$0xff]
        %v797 = vld [vmem:[%s670 + $0x90] sm:$0xff]
        %v798 = vld [vmem:[%s670 + $0x98] sm:$0xff]
        %v799 = vld [vmem:[%s670 + $0xa0] sm:$0xff]
        %v800 = vld [vmem:[%s670 + $0xa8] sm:$0xff]
        %v801 = vld [vmem:[%s670 + $0xb0] sm:$0xff]
        %v802 = vld [vmem:[%s670 + $0xb8] sm:$0xff]
        %v803 = vld [vmem:[%s670 + $0xc0] sm:$0xff]
        %v804 = vld [vmem:[%s670 + $0xc8] sm:$0xff]
        %v805 = vld [vmem:[%s670 + $0xd0] sm:$0xff]
        %v806 = vld [vmem:[%s670 + $0xd8] sm:$0xff]
        %v807 = vld [vmem:[%s670 + $0xe0] sm:$0xff]
        %v808 = vld [vmem:[%s670 + $0xe8] sm:$0xff]
        %v809 = vld [vmem:[%s670 + $0xf0] sm:$0xff]
        %v810 = vld [vmem:[%s670 + $0xf8] sm:$0xff]
        %v843 = vunpack.c.l.b16 %v779
        %v844 = vunpack.c.h.b16 %v779
        %v845 = vunpack.c.l.b16 %v780
        %v846 = vunpack.c.h.b16 %v780
        %v847 = vunpack.c.l.b16 %v781
        %v848 = vunpack.c.h.b16 %v781
        %v849 = vunpack.c.l.b16 %v782
        %v850 = vunpack.c.h.b16 %v782
        %v851 = vunpack.c.l.b16 %v783
        %v852 = vunpack.c.h.b16 %v783
        %v853 = vunpack.c.l.b16 %v784
        %v854 = vunpack.c.h.b16 %v784
        %v855 = vunpack.c.l.b16 %v785
        %v856 = vunpack.c.h.b16 %v785
        %v857 = vunpack.c.l.b16 %v786
        %v858 = vunpack.c.h.b16 %v786
        %v859 = vunpack.c.l.b16 %v787
        %v860 = vunpack.c.h.b16 %v787
        %v861 = vunpack.c.l.b16 %v788
        %v862 = vunpack.c.h.b16 %v788
        %v863 = vunpack.c.l.b16 %v789
        %v864 = vunpack.c.h.b16 %v789
        %v865 = vunpack.c.l.b16 %v790
        %v866 = vunpack.c.h.b16 %v790
        %v867 = vunpack.c.l.b16 %v791
        %v868 = vunpack.c.h.b16 %v791
        %v869 = vunpack.c.l.b16 %v792
        %v870 = vunpack.c.h.b16 %v792
        %v871 = vunpack.c.l.b16 %v793
        %v872 = vunpack.c.h.b16 %v793
        %v873 = vunpack.c.l.b16 %v794
        %v874 = vunpack.c.h.b16 %v794
        %v875 = vunpack.c.l.b16 %v795
        %v876 = vunpack.c.h.b16 %v795
        %v877 = vunpack.c.l.b16 %v796
        %v878 = vunpack.c.h.b16 %v796
        %v879 = vunpack.c.l.b16 %v797
        %v880 = vunpack.c.h.b16 %v797
        %v881 = vunpack.c.l.b16 %v798
        %v882 = vunpack.c.h.b16 %v798
        %v883 = vunpack.c.l.b16 %v799
        %v884 = vunpack.c.h.b16 %v799
        %v885 = vunpack.c.l.b16 %v800
        %v886 = vunpack.c.h.b16 %v800
        %v887 = vunpack.c.l.b16 %v801
        %v888 = vunpack.c.h.b16 %v801
        %v889 = vunpack.c.l.b16 %v802
        %v890 = vunpack.c.h.b16 %v802
        %v891 = vunpack.c.l.b16 %v803
        %v892 = vunpack.c.h.b16 %v803
        %v893 = vunpack.c.l.b16 %v804
        %v894 = vunpack.c.h.b16 %v804
        %v895 = vunpack.c.l.b16 %v805
        %v896 = vunpack.c.h.b16 %v805
        %v897 = vunpack.c.l.b16 %v806
        %v898 = vunpack.c.h.b16 %v806
        %v899 = vunpack.c.l.b16 %v807
        %v900 = vunpack.c.h.b16 %v807
        %v901 = vunpack.c.l.b16 %v808
        %v902 = vunpack.c.h.b16 %v808
        %v903 = vunpack.c.l.b16 %v809
        %v904 = vunpack.c.h.b16 %v809
        %v905 = vunpack.c.l.b16 %v810
        %v906 = vunpack.c.h.b16 %v810
        %v907 = vpack.c.b16 %v847, %v843
        %v908 = vpack.c.b16 %v848, %v844
        %v909 = vpack.c.b16 %v849, %v845
        %v910 = vpack.c.b16 %v850, %v846
        %v911 = vpack.c.b16 %v855, %v851
        %v912 = vpack.c.b16 %v856, %v852
        %v913 = vpack.c.b16 %v857, %v853
        %v914 = vpack.c.b16 %v858, %v854
        %v915 = vpack.c.b16 %v863, %v859
        %v916 = vpack.c.b16 %v864, %v860
        %v917 = vpack.c.b16 %v865, %v861
        %v918 = vpack.c.b16 %v866, %v862
        %v919 = vpack.c.b16 %v871, %v867
        %v920 = vpack.c.b16 %v872, %v868
        %v921 = vpack.c.b16 %v873, %v869
        %v922 = vpack.c.b16 %v874, %v870
        %v923 = vpack.c.b16 %v879, %v875
        %v924 = vpack.c.b16 %v880, %v876
        %v925 = vpack.c.b16 %v881, %v877
        %v926 = vpack.c.b16 %v882, %v878
        %v927 = vpack.c.b16 %v887, %v883
        %v928 = vpack.c.b16 %v888, %v884
        %v929 = vpack.c.b16 %v889, %v885
        %v930 = vpack.c.b16 %v890, %v886
        %v931 = vpack.c.b16 %v895, %v891
        %v932 = vpack.c.b16 %v896, %v892
        %v933 = vpack.c.b16 %v897, %v893
        %v934 = vpack.c.b16 %v898, %v894
        %v935 = vpack.c.b16 %v903, %v899
        %v936 = vpack.c.b16 %v904, %v900
        %v937 = vpack.c.b16 %v905, %v901
        %v938 = vpack.c.b16 %v906, %v902
        %971 = vmatprep.subr.bf16.mxu0 %v936
        %972 = vmatpush1.bf16.msra.mxu0 %v935
        %973 = vmatprep.subr.bf16.mxu0 %v932
        %974 = vmatpush1.bf16.msra.mxu0 %v931
        %975 = vmatprep.subr.bf16.mxu0 %v928
        %976 = vmatpush1.bf16.msra.mxu0 %v927
        %977 = vmatprep.subr.bf16.mxu0 %v924
        %978 = vmatpush1.bf16.msra.mxu0 %v923
        %979 = vmatprep.subr.bf16.mxu0 %v920
        %980 = vmatpush1.bf16.msra.mxu0 %v919
        %981 = vmatprep.subr.bf16.mxu0 %v916
        %982 = vmatpush1.bf16.msra.mxu0 %v915
        %983 = vmatprep.subr.bf16.mxu0 %v912
        %984 = vmatpush1.bf16.msra.mxu0 %v911
        %985 = vmatprep.subr.bf16.mxu0 %v908
        %986 = vmatpush1.bf16.msra.mxu0 %v907
        %987 = vmatprep.subr.bf16.mxu0 0
        %988 = vmatpush2.bf16.msra.mxu0 0
        %989 = vmatprep.subr.bf16.mxu0 0
        %990 = vmatpush2.bf16.msra.mxu0 0
        %991 = vmatprep.subr.bf16.mxu0 0
        %992 = vmatpush2.bf16.msra.mxu0 0
        %993 = vmatprep.subr.bf16.mxu0 0
        %994 = vmatpush2.bf16.msra.mxu0 0
        %995 = vmatprep.subr.bf16.mxu0 0
        %996 = vmatpush2.bf16.msra.mxu0 0
        %997 = vmatprep.subr.bf16.mxu0 0
        %998 = vmatpush2.bf16.msra.mxu0 0
        %999 = vmatprep.subr.bf16.mxu0 0
        %1000 = vmatpush2.bf16.msra.mxu0 0
        %1001 = vmatprep.subr.bf16.mxu0 0
        %1002 = vmatpush2.bf16.msra.mxu0 0
        %1003 = vmatprep.mubr.bf16.mxu0 0
        %1004 = vmatmul.mubr.bf16.gmra.mxu0 %v778
        %v1005 = vpop.f32.mrf.mxu0
        %v1006 = vadd.f32 0.0, %v1005
        %v1007 = vpop.f32.mrf.mxu0
        %v1008 = vadd.f32 0.0, %v1007
        %v1009 = vpop.f32.mrf.mxu0
        %v1010 = vpop.f32.mrf.mxu0
        %1011 = vdwg.mxu0
        %1012 = vmatprep.subr.bf16.mxu0 %v938
        %1013 = vmatpush1.bf16.msra.mxu0 %v937
        %1014 = vmatprep.subr.bf16.mxu0 %v934
        %1015 = vmatpush1.bf16.msra.mxu0 %v933
        %1016 = vmatprep.subr.bf16.mxu0 %v930
        %1017 = vmatpush1.bf16.msra.mxu0 %v929
        %1018 = vmatprep.subr.bf16.mxu0 %v926
        %1019 = vmatpush1.bf16.msra.mxu0 %v925
        %1020 = vmatprep.subr.bf16.mxu0 %v922
        %1021 = vmatpush1.bf16.msra.mxu0 %v921
        %1022 = vmatprep.subr.bf16.mxu0 %v918
        %1023 = vmatpush1.bf16.msra.mxu0 %v917
        %1024 = vmatprep.subr.bf16.mxu0 %v914
        %1025 = vmatpush1.bf16.msra.mxu0 %v913
        %1026 = vmatprep.subr.bf16.mxu0 %v910
        %1027 = vmatpush1.bf16.msra.mxu0 %v909
        %1028 = vmatprep.subr.bf16.mxu0 0
        %1029 = vmatpush2.bf16.msra.mxu0 0
        %1030 = vmatprep.subr.bf16.mxu0 0
        %1031 = vmatpush2.bf16.msra.mxu0 0
        %1032 = vmatprep.subr.bf16.mxu0 0
        %1033 = vmatpush2.bf16.msra.mxu0 0
        %1034 = vmatprep.subr.bf16.mxu0 0
        %1035 = vmatpush2.bf16.msra.mxu0 0
        %1036 = vmatprep.subr.bf16.mxu0 0
        %1037 = vmatpush2.bf16.msra.mxu0 0
        %1038 = vmatprep.subr.bf16.mxu0 0
        %1039 = vmatpush2.bf16.msra.mxu0 0
        %1040 = vmatprep.subr.bf16.mxu0 0
        %1041 = vmatpush2.bf16.msra.mxu0 0
        %1042 = vmatprep.subr.bf16.mxu0 0
        %1043 = vmatpush2.bf16.msra.mxu0 0
        %1044 = vmatprep.mubr.bf16.mxu0 0
        %1045 = vmatmul.mubr.bf16.gmra.mxu0 %v778
        %v1046 = vpop.f32.mrf.mxu0
        %v1047 = vadd.f32 0.0, %v1046
        %v1048 = vpop.f32.mrf.mxu0
        %v1049 = vadd.f32 0.0, %v1048
        %v1050 = vpop.f32.mrf.mxu0
        %v1051 = vpop.f32.mrf.mxu0
        %1052 = vdwg.mxu0
        %v1053 = vadd.f32 %v773, %v1006
        %v1054 = vadd.f32 %v774, %v1008
        %v1055 = vadd.f32 %v775, %v1047
        %v1056 = vadd.f32 %v776, %v1049
        %1057 = vst [vmem:[#allocation2] sm:$0xff] %v1053
        %1058 = vst [vmem:[#allocation2 + $0x8] sm:$0xff] %v1054
        %1059 = vst [vmem:[#allocation2 + $0x10] sm:$0xff] %v1055
        %1060 = vst [vmem:[#allocation2 + $0x18] sm:$0xff] %v1056
        %p1061 = scmp.eq.s32.totalorder %s51, 1
        // Predicated region
        $region125: #{tpu_custom_call.1} parent=79 // pred_check
          %p1062 = pneg %p1061
        $region126: #{tpu_custom_call.1} parent=79 // pred_check_branch
          %1064 = sbr.rel (%p1062) target = $region128
        $region127: #{tpu_custom_call.1} parent=79 // pred_region
          %v1065 = vld [vmem:[#allocation2] sm:$0xff]
          %v1066 = vld [vmem:[#allocation2 + $0x8] sm:$0xff]
          %v1067 = vld [vmem:[#allocation2 + $0x10] sm:$0xff]
          %v1068 = vld [vmem:[#allocation2 + $0x18] sm:$0xff]
          %v1069 = vld [vmem:[%s4] sm:$0xf]
          %v1071 = vlaneseq
          %v1072 = vshrl.u32 %v1071, 7
          %v1073 = vsub.s32 0, %v1072
          %v1074 = vrot.slane %v1069, %v1073
          %v1075 = vlaneseq
          %v1076 = vshrl.u32 %v1075, 7
          %v1077 = vsub.s32 1, %v1076
          %v1078 = vrot.slane %v1069, %v1077
          %v1079 = vlaneseq
          %v1080 = vshrl.u32 %v1079, 7
          %v1081 = vsub.s32 2, %v1080
          %v1082 = vrot.slane %v1069, %v1081
          %v1083 = vlaneseq
          %v1084 = vshrl.u32 %v1083, 7
          %v1085 = vsub.s32 3, %v1084
          %v1086 = vrot.slane %v1069, %v1085
          %v1091 = vadd.f32 %v1065, %v1074
          %v1092 = vadd.f32 %v1066, %v1078
          %v1093 = vadd.f32 %v1067, %v1082
          %v1094 = vadd.f32 %v1068, %v1086
          %v1095 = vtanh.pop %v1091
          %v1096 = vtanh.pop %v1093
          %v1097 = vld [vmem:[#allocation11] sm:$0xff]
          %v1098 = vld [vmem:[#allocation11 + $0x8] sm:$0xff]
          %v1099 = vld [vmem:[#allocation11 + $0x10] sm:$0xff]
          %v1100 = vld [vmem:[#allocation11 + $0x18] sm:$0xff]
          %v1101 = vld [vmem:[#allocation11 + $0x20] sm:$0xff]
          %v1102 = vld [vmem:[#allocation11 + $0x28] sm:$0xff]
          %v1103 = vld [vmem:[#allocation11 + $0x30] sm:$0xff]
          %v1104 = vld [vmem:[#allocation11 + $0x38] sm:$0xff]
          %v1105 = vld [vmem:[#allocation11 + $0x40] sm:$0xff]
          %v1106 = vld [vmem:[#allocation11 + $0x48] sm:$0xff]
          %v1107 = vld [vmem:[#allocation11 + $0x50] sm:$0xff]
          %v1108 = vld [vmem:[#allocation11 + $0x58] sm:$0xff]
          %v1109 = vld [vmem:[#allocation11 + $0x60] sm:$0xff]
          %v1110 = vld [vmem:[#allocation11 + $0x68] sm:$0xff]
          %v1111 = vld [vmem:[#allocation11 + $0x70] sm:$0xff]
          %v1112 = vld [vmem:[#allocation11 + $0x78] sm:$0xff]
          %v1113 = vld [vmem:[#allocation12] sm:$0x1]
          %v1115 = vlaneseq
          %v1116 = vshrl.u32 %v1115, 7
          %v1117 = vsub.s32 0, %v1116
          %v1118 = vrot.slane %v1113, %v1117
          %1120 = vmatprep.subr.mxu0 0.0
          %1121 = vmatpush1.msra.mxu0 %v1112
          %1122 = vmatprep.subr.mxu0 0.0
          %1123 = vmatpush1.msra.mxu0 %v1111
          %1124 = vmatprep.subr.mxu0 0.0
          %1125 = vmatpush1.msra.mxu0 %v1110
          %1126 = vmatprep.subr.mxu0 0.0
          %1127 = vmatpush1.msra.mxu0 %v1109
          %1128 = vmatprep.subr.mxu0 0.0
          %1129 = vmatpush1.msra.mxu0 %v1108
          %1130 = vmatprep.subr.mxu0 0.0
          %1131 = vmatpush1.msra.mxu0 %v1107
          %1132 = vmatprep.subr.mxu0 0.0
          %1133 = vmatpush1.msra.mxu0 %v1106
          %1134 = vmatprep.subr.mxu0 0.0
          %1135 = vmatpush1.msra.mxu0 %v1105
          %1136 = vmatprep.subr.mxu0 0.0
          %1137 = vmatpush1.msra.mxu0 %v1104
          %1138 = vmatprep.subr.mxu0 0.0
          %1139 = vmatpush1.msra.mxu0 %v1103
          %1140 = vmatprep.subr.mxu0 0.0
          %1141 = vmatpush1.msra.mxu0 %v1102
          %1142 = vmatprep.subr.mxu0 0.0
          %1143 = vmatpush1.msra.mxu0 %v1101
          %1144 = vmatprep.subr.mxu0 0.0
          %1145 = vmatpush1.msra.mxu0 %v1100
          %1146 = vmatprep.subr.mxu0 0.0
          %1147 = vmatpush1.msra.mxu0 %v1099
          %1148 = vmatprep.subr.mxu0 0.0
          %1149 = vmatpush1.msra.mxu0 %v1098
          %1150 = vmatprep.subr.mxu0 0.0
          %1151 = vmatpush1.msra.mxu0 %v1097
          %1152 = vmatprep.subr.mxu0 0.0
          %1153 = vmatpush2.msra.mxu0 0.0
          %1154 = vmatprep.subr.mxu0 0.0
          %1155 = vmatpush2.msra.mxu0 0.0
          %1156 = vmatprep.subr.mxu0 0.0
          %1157 = vmatpush2.msra.mxu0 0.0
          %1158 = vmatprep.subr.mxu0 0.0
          %1159 = vmatpush2.msra.mxu0 0.0
          %1160 = vmatprep.subr.mxu0 0.0
          %1161 = vmatpush2.msra.mxu0 0.0
          %1162 = vmatprep.subr.mxu0 0.0
          %1163 = vmatpush2.msra.mxu0 0.0
          %1164 = vmatprep.subr.mxu0 0.0
          %1165 = vmatpush2.msra.mxu0 0.0
          %1166 = vmatprep.subr.mxu0 0.0
          %1167 = vmatpush2.msra.mxu0 0.0
          %1168 = vmatprep.subr.mxu0 0.0
          %1169 = vmatpush2.msra.mxu0 0.0
          %1170 = vmatprep.subr.mxu0 0.0
          %1171 = vmatpush2.msra.mxu0 0.0
          %1172 = vmatprep.subr.mxu0 0.0
          %1173 = vmatpush2.msra.mxu0 0.0
          %1174 = vmatprep.subr.mxu0 0.0
          %1175 = vmatpush2.msra.mxu0 0.0
          %1176 = vmatprep.subr.mxu0 0.0
          %1177 = vmatpush2.msra.mxu0 0.0
          %1178 = vmatprep.subr.mxu0 0.0
          %1179 = vmatpush2.msra.mxu0 0.0
          %1180 = vmatprep.subr.mxu0 0.0
          %1181 = vmatpush2.msra.mxu0 0.0
          %1182 = vmatprep.subr.mxu0 0.0
          %1183 = vmatpush2.msra.mxu0 0.0
          %1184 = vmatprep.mubr.f32.mxu0 0.0
          %1185 = vmatmul.mubr.f32.gmra.mxu0 %v1095
          %v1186 = vpop.f32.mrf.mxu0
          %v1187 = vadd.f32 %v1118, %v1186
          %v1188 = vpop.f32.mrf.mxu0
          %1189 = vdwg.mxu0
          %v1190 = vadd.f32 %v1187, %v1092
          %v1191 = vld [vmem:[%s652] sm:$0xff]
          %v1192 = vld [vmem:[%s652 + $0x8] sm:$0xff]
          %v1193 = vld [vmem:[%s652 + $0x10] sm:$0xff]
          %v1194 = vld [vmem:[%s652 + $0x18] sm:$0xff]
          %v1195 = vadd.f32 %v1191, 1e-20
          %v1196 = vadd.f32 %v1192, 1e-20
          %v1197 = vadd.f32 %v1193, 1e-20
          %v1198 = vadd.f32 %v1194, 1e-20
          %v1199 = vlog2.pop %v1195
          %v1200 = vmul.f32 %v1199, 0.6931472
          %v1201 = vlog2.pop %v1196
          %v1202 = vmul.f32 %v1201, 0.6931472
          %v1203 = vlog2.pop %v1197
          %v1204 = vmul.f32 %v1203, 0.6931472
          %v1205 = vlog2.pop %v1198
          %v1206 = vmul.f32 %v1205, 0.6931472
          %v1207 = vsub.f32 0.0, %v1200
          %v1208 = vsub.f32 0.0, %v1202
          %v1209 = vsub.f32 0.0, %v1204
          %v1210 = vsub.f32 0.0, %v1206
          %v1211 = vadd.f32 %v1207, 1e-20
          %v1212 = vadd.f32 %v1208, 1e-20
          %v1213 = vadd.f32 %v1209, 1e-20
          %v1214 = vadd.f32 %v1210, 1e-20
          %v1215 = vlog2.pop %v1211
          %v1216 = vmul.f32 %v1215, 0.6931472
          %v1217 = vlog2.pop %v1212
          %v1218 = vmul.f32 %v1217, 0.6931472
          %v1219 = vlog2.pop %v1213
          %v1220 = vmul.f32 %v1219, 0.6931472
          %v1221 = vlog2.pop %v1214
          %v1222 = vmul.f32 %v1221, 0.6931472
          %v1223 = vsub.f32 0.0, %v1216
          %v1224 = vsub.f32 0.0, %v1218
          %v1225 = vsub.f32 0.0, %v1220
          %v1226 = vsub.f32 0.0, %v1222
          %v1227 = vlaneseq
          %v1228 = vand.u32 %v1227, 127
          %vm1229 = vcmp.lt.s32.totalorder %v1228, 16
          %v1230 = vadd.f32 %v1190, %v1223
          %v1231 = vadd.f32 %v1190, %v1224
          %v1232 = vadd.f32 %v1190, %v1225
          %v1233 = vadd.f32 %v1190, %v1226
          %v1234 = vsel %vm1229, %v1230, -1e+30
          %v1235 = vsel %vm1229, %v1231, -1e+30
          %v1236 = vsel %vm1229, %v1232, -1e+30
          %v1237 = vsel %vm1229, %v1233, -1e+30
          %1238 = vmax.xlane.f32.xlu0 %v1234
          %v1239 = vpop.xlane.xlu0 %1238
          %1240 = vmax.xlane.f32.xlu0 %v1235
          %v1241 = vpop.xlane.xlu0 %1240
          %1242 = vmax.xlane.f32.xlu0 %v1236
          %v1243 = vpop.xlane.xlu0 %1242
          %1244 = vmax.xlane.f32.xlu0 %v1237
          %v1245 = vpop.xlane.xlu0 %1244
          %vm1246 = vcmp.ge.f32.partialorder %v1234, %v1239
          %v1247 = vsel %vm1246, %v1228, 128
          %v1248 = vand.u32 %v1247, 65535
          %v1249 = vshra.s32 %v1247, 16
          %v1250 = vcvt.s32.f32 %v1248
          %v1251 = vcvt.s32.f32 %v1249
          %1252 = vmin.xlane.f32.xlu0 %v1251
          %v1253 = vpop.xlane.xlu0 %1252
          %vm1254 = vcmp.eq.f32.partialorder %v1251, %v1253
          %v1255 = vsel %vm1254, %v1250, inf
          %1256 = vmin.xlane.f32.xlu0 %v1255
          %v1257 = vpop.xlane.xlu0 %1256
          %v1258 = vcvt.f32.s32 %v1257
          %v1259 = vcvt.f32.s32 %v1253
          %v1260 = vshll.u32 %v1259, 16
          %v1261 = vadd.s32 %v1260, %v1258
          %vm1262 = vcmp.ge.f32.partialorder %v1235, %v1241
          %v1263 = vsel %vm1262, %v1228, 128
          %v1264 = vand.u32 %v1263, 65535
          %v1265 = vshra.s32 %v1263, 16
          %v1266 = vcvt.s32.f32 %v1264
          %v1267 = vcvt.s32.f32 %v1265
          %1268 = vmin.xlane.f32.xlu0 %v1267
          %v1269 = vpop.xlane.xlu0 %1268
          %vm1270 = vcmp.eq.f32.partialorder %v1267, %v1269
          %v1271 = vsel %vm1270, %v1266, inf
          %1272 = vmin.xlane.f32.xlu0 %v1271
          %v1273 = vpop.xlane.xlu0 %1272
          %v1274 = vcvt.f32.s32 %v1273
          %v1275 = vcvt.f32.s32 %v1269
          %v1276 = vshll.u32 %v1275, 16
          %v1277 = vadd.s32 %v1276, %v1274
          %vm1278 = vcmp.ge.f32.partialorder %v1236, %v1243
          %v1279 = vsel %vm1278, %v1228, 128
          %v1280 = vand.u32 %v1279, 65535
          %v1281 = vshra.s32 %v1279, 16
          %v1282 = vcvt.s32.f32 %v1280
          %v1283 = vcvt.s32.f32 %v1281
          %1284 = vmin.xlane.f32.xlu0 %v1283
          %v1285 = vpop.xlane.xlu0 %1284
          %vm1286 = vcmp.eq.f32.partialorder %v1283, %v1285
          %v1287 = vsel %vm1286, %v1282, inf
          %1288 = vmin.xlane.f32.xlu0 %v1287
          %v1289 = vpop.xlane.xlu0 %1288
          %v1290 = vcvt.f32.s32 %v1289
          %v1291 = vcvt.f32.s32 %v1285
          %v1292 = vshll.u32 %v1291, 16
          %v1293 = vadd.s32 %v1292, %v1290
          %vm1294 = vcmp.ge.f32.partialorder %v1237, %v1245
          %v1295 = vsel %vm1294, %v1228, 128
          %v1296 = vand.u32 %v1295, 65535
          %v1297 = vshra.s32 %v1295, 16
          %v1298 = vcvt.s32.f32 %v1296
          %v1299 = vcvt.s32.f32 %v1297
          %1300 = vmin.xlane.f32.xlu0 %v1299
          %v1301 = vpop.xlane.xlu0 %1300
          %vm1302 = vcmp.eq.f32.partialorder %v1299, %v1301
          %v1303 = vsel %vm1302, %v1298, inf
          %1304 = vmin.xlane.f32.xlu0 %v1303
          %v1305 = vpop.xlane.xlu0 %1304
          %v1306 = vcvt.f32.s32 %v1305
          %v1307 = vcvt.f32.s32 %v1301
          %v1308 = vshll.u32 %v1307, 16
          %v1309 = vadd.s32 %v1308, %v1306
          %vm1310 = vcmask 7168
          %v1311 = vsel %vm1310, %v1261, %v1277
          %vm1312 = vcmask 15360
          %v1313 = vsel %vm1312, %v1311, %v1293
          %vm1314 = vcmask 23552
          %v1315 = vsel %vm1314, %v1313, %v1309
          %v1316 = vcvt.s32.f32 %v1315
          %vm1317 = vcmask 31744
          %v1318 = vsel %vm1317, %v1316, 0.0
          %v1319 = vsub.f32 %v1234, %v1239
          %v1320 = vsub.f32 %v1235, %v1241
          %v1321 = vsub.f32 %v1236, %v1243
          %v1322 = vsub.f32 %v1237, %v1245
          %v1323 = vmul.f32 %v1319, 1.442695
          %v1324 = vpow.pop %v1323
          %v1325 = vmul.f32 %v1320, 1.442695
          %v1326 = vpow.pop %v1325
          %v1327 = vmul.f32 %v1321, 1.442695
          %v1328 = vpow.pop %v1327
          %v1329 = vmul.f32 %v1322, 1.442695
          %v1330 = vpow.pop %v1329
          %1331 = vadd.xlane.f32.xlu0 %v1324
          %v1332 = vpop.xlane.xlu0 %1331
          %1333 = vadd.xlane.f32.xlu0 %v1326
          %v1334 = vpop.xlane.xlu0 %1333
          %1335 = vadd.xlane.f32.xlu0 %v1328
          %v1336 = vpop.xlane.xlu0 %1335
          %1337 = vadd.xlane.f32.xlu0 %v1330
          %v1338 = vpop.xlane.xlu0 %1337
          %v1339 = vrcp.pop %v1332
          %v1340 = vrcp.pop %v1334
          %v1341 = vrcp.pop %v1336
          %v1342 = vrcp.pop %v1338
          %v1343 = vmul.f32 %v1324, %v1339
          %v1344 = vmul.f32 %v1326, %v1340
          %v1345 = vmul.f32 %v1328, %v1341
          %v1346 = vmul.f32 %v1330, %v1342
          %v1347 = vadd.f32 %v1343, %v1344
          %v1348 = vadd.f32 %v1347, %v1345
          %v1349 = vadd.f32 %v1348, %v1346
          %v1350 = vrcp.pop 4.0
          %v1351 = vmul.f32 %v1349, %v1350
          %v1352 = vld [vmem:[#allocation14] sm:$0xff]
          %v1353 = vld [vmem:[#allocation14 + $0x8] sm:$0xff]
          %v1354 = vld [vmem:[#allocation14 + $0x10] sm:$0xff]
          %v1355 = vld [vmem:[#allocation14 + $0x18] sm:$0xff]
          %v1356 = vld [vmem:[#allocation14 + $0x20] sm:$0xff]
          %v1357 = vld [vmem:[#allocation14 + $0x28] sm:$0xff]
          %v1358 = vld [vmem:[#allocation14 + $0x30] sm:$0xff]
          %v1359 = vld [vmem:[#allocation14 + $0x38] sm:$0xff]
          %v1360 = vld [vmem:[#allocation14 + $0x40] sm:$0xff]
          %v1361 = vld [vmem:[#allocation14 + $0x48] sm:$0xff]
          %v1362 = vld [vmem:[#allocation14 + $0x50] sm:$0xff]
          %v1363 = vld [vmem:[#allocation14 + $0x58] sm:$0xff]
          %v1364 = vld [vmem:[#allocation14 + $0x60] sm:$0xff]
          %v1365 = vld [vmem:[#allocation14 + $0x68] sm:$0xff]
          %v1366 = vld [vmem:[#allocation14 + $0x70] sm:$0xff]
          %v1367 = vld [vmem:[#allocation14 + $0x78] sm:$0xff]
          %v1368 = vld [vmem:[%s8] sm:$0x1]
          %v1370 = vlaneseq
          %v1371 = vshrl.u32 %v1370, 7
          %v1372 = vsub.s32 0, %v1371
          %v1373 = vrot.slane %v1368, %v1372
          %1375 = vmatprep.subr.mxu0 0.0
          %1376 = vmatpush1.msra.mxu0 %v1367
          %1377 = vmatprep.subr.mxu0 0.0
          %1378 = vmatpush1.msra.mxu0 %v1366
          %1379 = vmatprep.subr.mxu0 0.0
          %1380 = vmatpush1.msra.mxu0 %v1365
          %1381 = vmatprep.subr.mxu0 0.0
          %1382 = vmatpush1.msra.mxu0 %v1364
          %1383 = vmatprep.subr.mxu0 0.0
          %1384 = vmatpush1.msra.mxu0 %v1363
          %1385 = vmatprep.subr.mxu0 0.0
          %1386 = vmatpush1.msra.mxu0 %v1362
          %1387 = vmatprep.subr.mxu0 0.0
          %1388 = vmatpush1.msra.mxu0 %v1361
          %1389 = vmatprep.subr.mxu0 0.0
          %1390 = vmatpush1.msra.mxu0 %v1360
          %1391 = vmatprep.subr.mxu0 0.0
          %1392 = vmatpush1.msra.mxu0 %v1359
          %1393 = vmatprep.subr.mxu0 0.0
          %1394 = vmatpush1.msra.mxu0 %v1358
          %1395 = vmatprep.subr.mxu0 0.0
          %1396 = vmatpush1.msra.mxu0 %v1357
          %1397 = vmatprep.subr.mxu0 0.0
          %1398 = vmatpush1.msra.mxu0 %v1356
          %1399 = vmatprep.subr.mxu0 0.0
          %1400 = vmatpush1.msra.mxu0 %v1355
          %1401 = vmatprep.subr.mxu0 0.0
          %1402 = vmatpush1.msra.mxu0 %v1354
          %1403 = vmatprep.subr.mxu0 0.0
          %1404 = vmatpush1.msra.mxu0 %v1353
          %1405 = vmatprep.subr.mxu0 0.0
          %1406 = vmatpush1.msra.mxu0 %v1352
          %1407 = vmatprep.subr.mxu0 0.0
          %1408 = vmatpush2.msra.mxu0 0.0
          %1409 = vmatprep.subr.mxu0 0.0
          %1410 = vmatpush2.msra.mxu0 0.0
          %1411 = vmatprep.subr.mxu0 0.0
          %1412 = vmatpush2.msra.mxu0 0.0
          %1413 = vmatprep.subr.mxu0 0.0
          %1414 = vmatpush2.msra.mxu0 0.0
          %1415 = vmatprep.subr.mxu0 0.0
          %1416 = vmatpush2.msra.mxu0 0.0
          %1417 = vmatprep.subr.mxu0 0.0
          %1418 = vmatpush2.msra.mxu0 0.0
          %1419 = vmatprep.subr.mxu0 0.0
          %1420 = vmatpush2.msra.mxu0 0.0
          %1421 = vmatprep.subr.mxu0 0.0
          %1422 = vmatpush2.msra.mxu0 0.0
          %1423 = vmatprep.subr.mxu0 0.0
          %1424 = vmatpush2.msra.mxu0 0.0
          %1425 = vmatprep.subr.mxu0 0.0
          %1426 = vmatpush2.msra.mxu0 0.0
          %1427 = vmatprep.subr.mxu0 0.0
          %1428 = vmatpush2.msra.mxu0 0.0
          %1429 = vmatprep.subr.mxu0 0.0
          %1430 = vmatpush2.msra.mxu0 0.0
          %1431 = vmatprep.subr.mxu0 0.0
          %1432 = vmatpush2.msra.mxu0 0.0
          %1433 = vmatprep.subr.mxu0 0.0
          %1434 = vmatpush2.msra.mxu0 0.0
          %1435 = vmatprep.subr.mxu0 0.0
          %1436 = vmatpush2.msra.mxu0 0.0
          %1437 = vmatprep.subr.mxu0 0.0
          %1438 = vmatpush2.msra.mxu0 0.0
          %1439 = vmatprep.mubr.f32.mxu0 0.0
          %1440 = vmatmul.mubr.f32.gmra.mxu0 %v1096
          %v1441 = vpop.f32.mrf.mxu0
          %v1442 = vadd.f32 %v1373, %v1441
          %v1443 = vpop.f32.mrf.mxu0
          %1444 = vdwg.mxu0
          %v1445 = vadd.f32 %v1442, %v1094
          %v1446 = vtanh.pop %v1445
          %v1447 = vld [vmem:[#allocation15] sm:$0xff]
          %v1448 = vld [vmem:[#allocation15 + $0x8] sm:$0xff]
          %v1449 = vld [vmem:[#allocation15 + $0x10] sm:$0xff]
          %v1450 = vld [vmem:[#allocation15 + $0x18] sm:$0xff]
          %v1451 = vld [vmem:[#allocation15 + $0x20] sm:$0xff]
          %v1452 = vld [vmem:[#allocation15 + $0x28] sm:$0xff]
          %v1453 = vld [vmem:[#allocation15 + $0x30] sm:$0xff]
          %v1454 = vld [vmem:[#allocation15 + $0x38] sm:$0xff]
          %v1455 = vld [vmem:[#allocation15 + $0x40] sm:$0xff]
          %v1456 = vld [vmem:[#allocation15 + $0x48] sm:$0xff]
          %v1457 = vld [vmem:[#allocation15 + $0x50] sm:$0xff]
          %v1458 = vld [vmem:[#allocation15 + $0x58] sm:$0xff]
          %v1459 = vld [vmem:[#allocation15 + $0x60] sm:$0xff]
          %v1460 = vld [vmem:[#allocation15 + $0x68] sm:$0xff]
          %v1461 = vld [vmem:[#allocation15 + $0x70] sm:$0xff]
          %v1462 = vld [vmem:[#allocation15 + $0x78] sm:$0xff]
          %v1463 = vld [vmem:[#allocation15 + $0x80] sm:$0xff]
          %v1464 = vld [vmem:[#allocation15 + $0x88] sm:$0xff]
          %v1465 = vld [vmem:[#allocation15 + $0x90] sm:$0xff]
          %v1466 = vld [vmem:[#allocation15 + $0x98] sm:$0xff]
          %v1467 = vld [vmem:[#allocation15 + $0xa0] sm:$0xff]
          %v1468 = vld [vmem:[#allocation15 + $0xa8] sm:$0xff]
          %v1469 = vld [vmem:[#allocation15 + $0xb0] sm:$0xff]
          %v1470 = vld [vmem:[#allocation15 + $0xb8] sm:$0xff]
          %v1471 = vld [vmem:[#allocation15 + $0xc0] sm:$0xff]
          %v1472 = vld [vmem:[#allocation15 + $0xc8] sm:$0xff]
          %v1473 = vld [vmem:[#allocation15 + $0xd0] sm:$0xff]
          %v1474 = vld [vmem:[#allocation15 + $0xd8] sm:$0xff]
          %v1475 = vld [vmem:[#allocation15 + $0xe0] sm:$0xff]
          %v1476 = vld [vmem:[#allocation15 + $0xe8] sm:$0xff]
          %v1477 = vld [vmem:[#allocation15 + $0xf0] sm:$0xff]
          %v1478 = vld [vmem:[#allocation15 + $0xf8] sm:$0xff]
          %v1479 = vld [vmem:[%s10] sm:$0x3]
          %v1481 = vlaneseq
          %v1482 = vshrl.u32 %v1481, 7
          %v1483 = vsub.s32 0, %v1482
          %v1484 = vrot.slane %v1479, %v1483
          %v1485 = vlaneseq
          %v1486 = vshrl.u32 %v1485, 7
          %v1487 = vsub.s32 1, %v1486
          %v1488 = vrot.slane %v1479, %v1487
          %1491 = vmatprep.subr.mxu0 %v1478
          %1492 = vmatpush1.msra.mxu0 %v1477
          %1493 = vmatprep.subr.mxu0 %v1476
          %1494 = vmatpush1.msra.mxu0 %v1475
          %1495 = vmatprep.subr.mxu0 %v1474
          %1496 = vmatpush1.msra.mxu0 %v1473
          %1497 = vmatprep.subr.mxu0 %v1472
          %1498 = vmatpush1.msra.mxu0 %v1471
          %1499 = vmatprep.subr.mxu0 %v1470
          %1500 = vmatpush1.msra.mxu0 %v1469
          %1501 = vmatprep.subr.mxu0 %v1468
          %1502 = vmatpush1.msra.mxu0 %v1467
          %1503 = vmatprep.subr.mxu0 %v1466
          %1504 = vmatpush1.msra.mxu0 %v1465
          %1505 = vmatprep.subr.mxu0 %v1464
          %1506 = vmatpush1.msra.mxu0 %v1463
          %1507 = vmatprep.subr.mxu0 %v1462
          %1508 = vmatpush1.msra.mxu0 %v1461
          %1509 = vmatprep.subr.mxu0 %v1460
          %1510 = vmatpush1.msra.mxu0 %v1459
          %1511 = vmatprep.subr.mxu0 %v1458
          %1512 = vmatpush1.msra.mxu0 %v1457
          %1513 = vmatprep.subr.mxu0 %v1456
          %1514 = vmatpush1.msra.mxu0 %v1455
          %1515 = vmatprep.subr.mxu0 %v1454
          %1516 = vmatpush1.msra.mxu0 %v1453
          %1517 = vmatprep.subr.mxu0 %v1452
          %1518 = vmatpush1.msra.mxu0 %v1451
          %1519 = vmatprep.subr.mxu0 %v1450
          %1520 = vmatpush1.msra.mxu0 %v1449
          %1521 = vmatprep.subr.mxu0 %v1448
          %1522 = vmatpush1.msra.mxu0 %v1447
          %1523 = vmatprep.subr.mxu0 0.0
          %1524 = vmatpush2.msra.mxu0 0.0
          %1525 = vmatprep.subr.mxu0 0.0
          %1526 = vmatpush2.msra.mxu0 0.0
          %1527 = vmatprep.subr.mxu0 0.0
          %1528 = vmatpush2.msra.mxu0 0.0
          %1529 = vmatprep.subr.mxu0 0.0
          %1530 = vmatpush2.msra.mxu0 0.0
          %1531 = vmatprep.subr.mxu0 0.0
          %1532 = vmatpush2.msra.mxu0 0.0
          %1533 = vmatprep.subr.mxu0 0.0
          %1534 = vmatpush2.msra.mxu0 0.0
          %1535 = vmatprep.subr.mxu0 0.0
          %1536 = vmatpush2.msra.mxu0 0.0
          %1537 = vmatprep.subr.mxu0 0.0
          %1538 = vmatpush2.msra.mxu0 0.0
          %1539 = vmatprep.subr.mxu0 0.0
          %1540 = vmatpush2.msra.mxu0 0.0
          %1541 = vmatprep.subr.mxu0 0.0
          %1542 = vmatpush2.msra.mxu0 0.0
          %1543 = vmatprep.subr.mxu0 0.0
          %1544 = vmatpush2.msra.mxu0 0.0
          %1545 = vmatprep.subr.mxu0 0.0
          %1546 = vmatpush2.msra.mxu0 0.0
          %1547 = vmatprep.subr.mxu0 0.0
          %1548 = vmatpush2.msra.mxu0 0.0
          %1549 = vmatprep.subr.mxu0 0.0
          %1550 = vmatpush2.msra.mxu0 0.0
          %1551 = vmatprep.subr.mxu0 0.0
          %1552 = vmatpush2.msra.mxu0 0.0
          %1553 = vmatprep.subr.mxu0 0.0
          %1554 = vmatpush2.msra.mxu0 0.0
          %1555 = vmatprep.mubr.f32.mxu0 0.0
          %1556 = vmatmul.mubr.f32.gmra.mxu0 %v1446
          %v1557 = vpop.f32.mrf.mxu0
          %v1558 = vadd.f32 %v1484, %v1557
          %v1559 = vpop.f32.mrf.mxu0
          %v1560 = vadd.f32 %v1488, %v1559
          %1561 = vdwg.mxu0
          %v1562 = vld [vmem:[%s661] sm:$0xff]
          %v1563 = vmul.f32 %v1560, 0.5
          %v1564 = vmul.f32 %v1563, 1.442695
          %v1565 = vpow.pop %v1564
          %v1566 = vmul.f32 %v1562, %v1565
          %v1567 = vadd.f32 %v1566, %v1558
          %v1568 = vld [vmem:[#allocation17] sm:$0xff]
          %v1569 = vld [vmem:[#allocation17 + $0x8] sm:$0xff]
          %v1570 = vld [vmem:[#allocation17 + $0x10] sm:$0xff]
          %v1571 = vld [vmem:[#allocation17 + $0x18] sm:$0xff]
          %v1572 = vld [vmem:[#allocation17 + $0x20] sm:$0xff]
          %v1573 = vld [vmem:[#allocation17 + $0x28] sm:$0xff]
          %v1574 = vld [vmem:[#allocation17 + $0x30] sm:$0xff]
          %v1575 = vld [vmem:[#allocation17 + $0x38] sm:$0xff]
          %v1576 = vld [vmem:[#allocation17 + $0x40] sm:$0xff]
          %v1577 = vld [vmem:[#allocation17 + $0x48] sm:$0xff]
          %v1578 = vld [vmem:[#allocation17 + $0x50] sm:$0xff]
          %v1579 = vld [vmem:[#allocation17 + $0x58] sm:$0xff]
          %v1580 = vld [vmem:[#allocation17 + $0x60] sm:$0xff]
          %v1581 = vld [vmem:[#allocation17 + $0x68] sm:$0xff]
          %v1582 = vld [vmem:[#allocation17 + $0x70] sm:$0xff]
          %v1583 = vld [vmem:[#allocation17 + $0x78] sm:$0xff]
          %v1584 = vld [vmem:[#allocation17 + $0x80] sm:$0xff]
          %v1585 = vld [vmem:[#allocation17 + $0x88] sm:$0xff]
          %v1586 = vld [vmem:[#allocation17 + $0x90] sm:$0xff]
          %v1587 = vld [vmem:[#allocation17 + $0x98] sm:$0xff]
          %v1588 = vld [vmem:[#allocation17 + $0xa0] sm:$0xff]
          %v1589 = vld [vmem:[#allocation17 + $0xa8] sm:$0xff]
          %v1590 = vld [vmem:[#allocation17 + $0xb0] sm:$0xff]
          %v1591 = vld [vmem:[#allocation17 + $0xb8] sm:$0xff]
          %v1592 = vld [vmem:[#allocation17 + $0xc0] sm:$0xff]
          %v1593 = vld [vmem:[#allocation17 + $0xc8] sm:$0xff]
          %v1594 = vld [vmem:[#allocation17 + $0xd0] sm:$0xff]
          %v1595 = vld [vmem:[#allocation17 + $0xd8] sm:$0xff]
          %v1596 = vld [vmem:[#allocation17 + $0xe0] sm:$0xff]
          %v1597 = vld [vmem:[#allocation17 + $0xe8] sm:$0xff]
          %v1598 = vld [vmem:[#allocation17 + $0xf0] sm:$0xff]
          %v1599 = vld [vmem:[#allocation17 + $0xf8] sm:$0xff]
          %v1600 = vld [vmem:[%s12] sm:$0x3]
          %v1602 = vlaneseq
          %v1603 = vshrl.u32 %v1602, 7
          %v1604 = vsub.s32 0, %v1603
          %v1605 = vrot.slane %v1600, %v1604
          %v1606 = vlaneseq
          %v1607 = vshrl.u32 %v1606, 7
          %v1608 = vsub.s32 1, %v1607
          %v1609 = vrot.slane %v1600, %v1608
          %1612 = vmatprep.subr.mxu0 %v1599
          %1613 = vmatpush1.msra.mxu0 %v1598
          %1614 = vmatprep.subr.mxu0 %v1597
          %1615 = vmatpush1.msra.mxu0 %v1596
          %1616 = vmatprep.subr.mxu0 %v1595
          %1617 = vmatpush1.msra.mxu0 %v1594
          %1618 = vmatprep.subr.mxu0 %v1593
          %1619 = vmatpush1.msra.mxu0 %v1592
          %1620 = vmatprep.subr.mxu0 %v1591
          %1621 = vmatpush1.msra.mxu0 %v1590
          %1622 = vmatprep.subr.mxu0 %v1589
          %1623 = vmatpush1.msra.mxu0 %v1588
          %1624 = vmatprep.subr.mxu0 %v1587
          %1625 = vmatpush1.msra.mxu0 %v1586
          %1626 = vmatprep.subr.mxu0 %v1585
          %1627 = vmatpush1.msra.mxu0 %v1584
          %1628 = vmatprep.subr.mxu0 %v1583
          %1629 = vmatpush1.msra.mxu0 %v1582
          %1630 = vmatprep.subr.mxu0 %v1581
          %1631 = vmatpush1.msra.mxu0 %v1580
          %1632 = vmatprep.subr.mxu0 %v1579
          %1633 = vmatpush1.msra.mxu0 %v1578
          %1634 = vmatprep.subr.mxu0 %v1577
          %1635 = vmatpush1.msra.mxu0 %v1576
          %1636 = vmatprep.subr.mxu0 %v1575
          %1637 = vmatpush1.msra.mxu0 %v1574
          %1638 = vmatprep.subr.mxu0 %v1573
          %1639 = vmatpush1.msra.mxu0 %v1572
          %1640 = vmatprep.subr.mxu0 %v1571
          %1641 = vmatpush1.msra.mxu0 %v1570
          %1642 = vmatprep.subr.mxu0 %v1569
          %1643 = vmatpush1.msra.mxu0 %v1568
          %1644 = vmatprep.subr.mxu0 0.0
          %1645 = vmatpush2.msra.mxu0 0.0
          %1646 = vmatprep.subr.mxu0 0.0
          %1647 = vmatpush2.msra.mxu0 0.0
          %1648 = vmatprep.subr.mxu0 0.0
          %1649 = vmatpush2.msra.mxu0 0.0
          %1650 = vmatprep.subr.mxu0 0.0
          %1651 = vmatpush2.msra.mxu0 0.0
          %1652 = vmatprep.subr.mxu0 0.0
          %1653 = vmatpush2.msra.mxu0 0.0
          %1654 = vmatprep.subr.mxu0 0.0
          %1655 = vmatpush2.msra.mxu0 0.0
          %1656 = vmatprep.subr.mxu0 0.0
          %1657 = vmatpush2.msra.mxu0 0.0
          %1658 = vmatprep.subr.mxu0 0.0
          %1659 = vmatpush2.msra.mxu0 0.0
          %1660 = vmatprep.subr.mxu0 0.0
          %1661 = vmatpush2.msra.mxu0 0.0
          %1662 = vmatprep.subr.mxu0 0.0
          %1663 = vmatpush2.msra.mxu0 0.0
          %1664 = vmatprep.subr.mxu0 0.0
          %1665 = vmatpush2.msra.mxu0 0.0
          %1666 = vmatprep.subr.mxu0 0.0
          %1667 = vmatpush2.msra.mxu0 0.0
          %1668 = vmatprep.subr.mxu0 0.0
          %1669 = vmatpush2.msra.mxu0 0.0
          %1670 = vmatprep.subr.mxu0 0.0
          %1671 = vmatpush2.msra.mxu0 0.0
          %1672 = vmatprep.subr.mxu0 0.0
          %1673 = vmatpush2.msra.mxu0 0.0
          %1674 = vmatprep.subr.mxu0 0.0
          %1675 = vmatpush2.msra.mxu0 0.0
          %1676 = vmatprep.mubr.f32.mxu0 0.0
          %1677 = vmatmul.mubr.f32.gmra.mxu0 %v1351
          %v1678 = vpop.f32.mrf.mxu0
          %v1679 = vadd.f32 %v1605, %v1678
          %v1680 = vpop.f32.mrf.mxu0
          %v1681 = vadd.f32 %v1609, %v1680
          %1682 = vdwg.mxu0
          %v1683 = vld [vmem:[#allocation18] sm:$0xff]
          %v1684 = vld [vmem:[#allocation18 + $0x8] sm:$0xff]
          %v1685 = vld [vmem:[#allocation18 + $0x10] sm:$0xff]
          %v1686 = vld [vmem:[#allocation18 + $0x18] sm:$0xff]
          %v1687 = vld [vmem:[#allocation18 + $0x20] sm:$0xff]
          %v1688 = vld [vmem:[#allocation18 + $0x28] sm:$0xff]
          %v1689 = vld [vmem:[#allocation18 + $0x30] sm:$0xff]
          %v1690 = vld [vmem:[#allocation18 + $0x38] sm:$0xff]
          %v1691 = vld [vmem:[#allocation18 + $0x40] sm:$0xff]
          %v1692 = vld [vmem:[#allocation18 + $0x48] sm:$0xff]
          %v1693 = vld [vmem:[#allocation18 + $0x50] sm:$0xff]
          %v1694 = vld [vmem:[#allocation18 + $0x58] sm:$0xff]
          %v1695 = vld [vmem:[#allocation18 + $0x60] sm:$0xff]
          %v1696 = vld [vmem:[#allocation18 + $0x68] sm:$0xff]
          %v1697 = vld [vmem:[#allocation18 + $0x70] sm:$0xff]
          %v1698 = vld [vmem:[#allocation18 + $0x78] sm:$0xff]
          %v1699 = vld [vmem:[#allocation18 + $0x80] sm:$0xff]
          %v1700 = vld [vmem:[#allocation18 + $0x88] sm:$0xff]
          %v1701 = vld [vmem:[#allocation18 + $0x90] sm:$0xff]
          %v1702 = vld [vmem:[#allocation18 + $0x98] sm:$0xff]
          %v1703 = vld [vmem:[#allocation18 + $0xa0] sm:$0xff]
          %v1704 = vld [vmem:[#allocation18 + $0xa8] sm:$0xff]
          %v1705 = vld [vmem:[#allocation18 + $0xb0] sm:$0xff]
          %v1706 = vld [vmem:[#allocation18 + $0xb8] sm:$0xff]
          %v1707 = vld [vmem:[#allocation18 + $0xc0] sm:$0xff]
          %v1708 = vld [vmem:[#allocation18 + $0xc8] sm:$0xff]
          %v1709 = vld [vmem:[#allocation18 + $0xd0] sm:$0xff]
          %v1710 = vld [vmem:[#allocation18 + $0xd8] sm:$0xff]
          %v1711 = vld [vmem:[#allocation18 + $0xe0] sm:$0xff]
          %v1712 = vld [vmem:[#allocation18 + $0xe8] sm:$0xff]
          %v1713 = vld [vmem:[#allocation18 + $0xf0] sm:$0xff]
          %v1714 = vld [vmem:[#allocation18 + $0xf8] sm:$0xff]
          %v1715 = vld [vmem:[%s14] sm:$0x3]
          %v1717 = vlaneseq
          %v1718 = vshrl.u32 %v1717, 7
          %v1719 = vsub.s32 0, %v1718
          %v1720 = vrot.slane %v1715, %v1719
          %v1721 = vlaneseq
          %v1722 = vshrl.u32 %v1721, 7
          %v1723 = vsub.s32 1, %v1722
          %v1724 = vrot.slane %v1715, %v1723
          %1727 = vmatprep.subr.mxu0 %v1714
          %1728 = vmatpush1.msra.mxu0 %v1713
          %1729 = vmatprep.subr.mxu0 %v1712
          %1730 = vmatpush1.msra.mxu0 %v1711
          %1731 = vmatprep.subr.mxu0 %v1710
          %1732 = vmatpush1.msra.mxu0 %v1709
          %1733 = vmatprep.subr.mxu0 %v1708
          %1734 = vmatpush1.msra.mxu0 %v1707
          %1735 = vmatprep.subr.mxu0 %v1706
          %1736 = vmatpush1.msra.mxu0 %v1705
          %1737 = vmatprep.subr.mxu0 %v1704
          %1738 = vmatpush1.msra.mxu0 %v1703
          %1739 = vmatprep.subr.mxu0 %v1702
          %1740 = vmatpush1.msra.mxu0 %v1701
          %1741 = vmatprep.subr.mxu0 %v1700
          %1742 = vmatpush1.msra.mxu0 %v1699
          %1743 = vmatprep.subr.mxu0 %v1698
          %1744 = vmatpush1.msra.mxu0 %v1697
          %1745 = vmatprep.subr.mxu0 %v1696
          %1746 = vmatpush1.msra.mxu0 %v1695
          %1747 = vmatprep.subr.mxu0 %v1694
          %1748 = vmatpush1.msra.mxu0 %v1693
          %1749 = vmatprep.subr.mxu0 %v1692
          %1750 = vmatpush1.msra.mxu0 %v1691
          %1751 = vmatprep.subr.mxu0 %v1690
          %1752 = vmatpush1.msra.mxu0 %v1689
          %1753 = vmatprep.subr.mxu0 %v1688
          %1754 = vmatpush1.msra.mxu0 %v1687
          %1755 = vmatprep.subr.mxu0 %v1686
          %1756 = vmatpush1.msra.mxu0 %v1685
          %1757 = vmatprep.subr.mxu0 %v1684
          %1758 = vmatpush1.msra.mxu0 %v1683
          %1759 = vmatprep.subr.mxu0 0.0
          %1760 = vmatpush2.msra.mxu0 0.0
          %1761 = vmatprep.subr.mxu0 0.0
          %1762 = vmatpush2.msra.mxu0 0.0
          %1763 = vmatprep.subr.mxu0 0.0
          %1764 = vmatpush2.msra.mxu0 0.0
          %1765 = vmatprep.subr.mxu0 0.0
          %1766 = vmatpush2.msra.mxu0 0.0
          %1767 = vmatprep.subr.mxu0 0.0
          %1768 = vmatpush2.msra.mxu0 0.0
          %1769 = vmatprep.subr.mxu0 0.0
          %1770 = vmatpush2.msra.mxu0 0.0
          %1771 = vmatprep.subr.mxu0 0.0
          %1772 = vmatpush2.msra.mxu0 0.0
          %1773 = vmatprep.subr.mxu0 0.0
          %1774 = vmatpush2.msra.mxu0 0.0
          %1775 = vmatprep.subr.mxu0 0.0
          %1776 = vmatpush2.msra.mxu0 0.0
          %1777 = vmatprep.subr.mxu0 0.0
          %1778 = vmatpush2.msra.mxu0 0.0
          %1779 = vmatprep.subr.mxu0 0.0
          %1780 = vmatpush2.msra.mxu0 0.0
          %1781 = vmatprep.subr.mxu0 0.0
          %1782 = vmatpush2.msra.mxu0 0.0
          %1783 = vmatprep.subr.mxu0 0.0
          %1784 = vmatpush2.msra.mxu0 0.0
          %1785 = vmatprep.subr.mxu0 0.0
          %1786 = vmatpush2.msra.mxu0 0.0
          %1787 = vmatprep.subr.mxu0 0.0
          %1788 = vmatpush2.msra.mxu0 0.0
          %1789 = vmatprep.subr.mxu0 0.0
          %1790 = vmatpush2.msra.mxu0 0.0
          %1791 = vmatprep.mubr.f32.mxu0 0.0
          %1792 = vmatmul.mubr.f32.gmra.mxu0 %v1567
          %v1793 = vpop.f32.mrf.mxu0
          %v1794 = vadd.f32 %v1720, %v1793
          %v1795 = vpop.f32.mrf.mxu0
          %v1796 = vadd.f32 %v1724, %v1795
          %1797 = vdwg.mxu0
          %1798 = vst [vmem:[%s755] sm:$0xff] %v1190
          %1799 = vst [vmem:[%s755 + $0x8] sm:$0xff] %v1351
          %1800 = vst [vmem:[%s755 + $0x10] sm:$0xff] %v1679
          %1801 = vst [vmem:[%s755 + $0x18] sm:$0xff] %v1558
          %1802 = vst [vmem:[%s755 + $0x20] sm:$0xff] %v1560
          %1803 = vst [vmem:[%s755 + $0x28] sm:$0xff] %v1567
          %1804 = vst [vmem:[%s755 + $0x30] sm:$0xff] %v1794
          %1805 = vst [vmem:[%s755 + $0x38] sm:$0xff] %v1318
          %1807 = vrot.lane.b32.xlu0 %v1796, 16
          %v1808 = vpop.permute.xlu0 %1807
          %1811 = vrot.lane.b32.xlu0 %v1679, 32
          %v1812 = vpop.permute.xlu0 %1811
          %1815 = vrot.lane.b32.xlu0 %v1794, 48
          %v1816 = vpop.permute.xlu0 %1815
          %vm1818 = vcmask 130048
          %v1819 = vsel %vm1818, %v1681, %v1808
          %vm1820 = vcmask 261120
          %v1821 = vsel %vm1820, %v1819, %v1812
          %vm1822 = vcmask 392192
          %v1823 = vsel %vm1822, %v1821, %v1816
          %vm1824 = vcmask 523264
          %1825 = vst.msk [vmem:[%s762] sm:$0xff] %vm1824, %v1823
        $region128: #{tpu_custom_call.1} parent=79 // pred_fallthru
          _
        %s1826 = sand.u32 %s403, 1
        %s1827 = scalar_lea.sflag [#allocation5], %s1826
        %s1828 = sand.u32 %s403, 1
        %s1829 = smul.addr %s1828, 64
        %s1830 = scalar_lea.vmem [#allocation20], %s1829
        %s1831 = sand.u32 %s429, 1
        %s1832 = scalar_lea.sflag [#allocation22], %s1831
        %s1833 = sand.u32 %s429, 1
        %s1834 = smul.addr %s1833, 8
        %s1835 = scalar_lea.vmem [#allocation21], %s1834
        // Predicated region
        $region129: #{tpu_custom_call.1} parent=79 // pred_check
          %p1836 = pneg %p413
        $region130: #{tpu_custom_call.1} parent=79 // pred_check_branch
          %1838 = sbr.rel (%p1836) target = $region132
        $region131: #{tpu_custom_call.1} parent=79 // pred_region
          %s1840 = ssub.s32 1024, 1024
          %1841 = vsyncadd %s1827, %s1840
          %s1842 = smul.addr %s50, 8
          %s1843 = smul.addr %s1842, 128
          %s1844 = scalar_lea.hbm %s15, %s1843
          %s1846 = sshll.u32 %s1830, 4
          %s1847 = int_to_ptr.vmem [resolvable:$true] %s1846
          %1849 = dma.vmem_to_hbm [thread:$0]  %s1847, 1024, %s1844, %s1827
        $region132: #{tpu_custom_call.1} parent=79 // pred_fallthru
          _
        // Predicated region
        $region133: #{tpu_custom_call.1} parent=79 // pred_check
          %p1850 = pneg %p439
        $region134: #{tpu_custom_call.1} parent=79 // pred_check_branch
          %1852 = sbr.rel (%p1850) target = $region136
        $region135: #{tpu_custom_call.1} parent=79 // pred_region
          %s1854 = ssub.s32 128, 128
          %1855 = vsyncadd %s1832, %s1854
          %s1856 = smul.addr %s50, 128
          %s1857 = scalar_lea.hbm %s16, %s1856
          %s1859 = sshll.u32 %s1835, 4
          %s1860 = int_to_ptr.vmem [resolvable:$true] %s1859
          %1862 = dma.vmem_to_hbm [thread:$0]  %s1860, 128, %s1857, %s1832
        $region136: #{tpu_custom_call.1} parent=79 // pred_fallthru
          _
      $region80: #{tpu_custom_call.1} parent=5 // pred_fallthru
        _
      %p1863 = scmp.le.s32.totalorder 2, %s41
      // Predicated region
      $region137: #{tpu_custom_call.1} parent=5 // pred_check
        %p1864 = pneg %p1863
      $region138: #{tpu_custom_call.1} parent=5 // pred_check_branch
        %1866 = sbr.rel (%p1864) target = $region140
      $region139: #{tpu_custom_call.1} parent=5 // pred_region
        %s1867 = ssub.s32 %s41, 2
        // Predicated region
        $region141: #{tpu_custom_call.1} parent=139 // pred_check
          %p1868 = pneg %p419
        $region142: #{tpu_custom_call.1} parent=139 // pred_check_branch
          %1870 = sbr.rel (%p1868) target = $region144
        $region143: #{tpu_custom_call.1} parent=139 // pred_region
          %s1871 = sand.u32 %s404, 1
          %s1872 = scalar_lea.sflag [#allocation5], %s1871
          %s1873 = sand.u32 %s404, 1
          %s1874 = smul.addr %s1873, 64
          %s1875 = scalar_lea.vmem [#allocation20], %s1874
          %1876 = dma.done %s1872, 1024
        $region144: #{tpu_custom_call.1} parent=139 // pred_fallthru
          _
        // Predicated region
        $region145: #{tpu_custom_call.1} parent=139 // pred_check
          %p1877 = pneg %p445
        $region146: #{tpu_custom_call.1} parent=139 // pred_check_branch
          %1879 = sbr.rel (%p1877) target = $region148
        $region147: #{tpu_custom_call.1} parent=139 // pred_region
          %s1880 = sand.u32 %s430, 1
          %s1881 = scalar_lea.sflag [#allocation22], %s1880
          %s1882 = sand.u32 %s430, 1
          %s1883 = smul.addr %s1882, 8
          %s1884 = scalar_lea.vmem [#allocation21], %s1883
          %1885 = dma.done %s1881, 128
        $region148: #{tpu_custom_call.1} parent=139 // pred_fallthru
          _
      $region140: #{tpu_custom_call.1} parent=5 // pred_fallthru
        _
    $region6: #{tpu_custom_call.1} parent=1 // loop_footer
      %s45 = sadd.s32 1, %s41
    $region7: #{tpu_custom_call.1} parent=1 // loop_footer_branch
      %40 = sbr.rel target = $region3
    $region8: #{tpu_custom_call.1} parent=1 // loop_exit
      _
    %1886 = vsyncpa [#allocation4], 1
    %s1887 = scalar_lea.sflag [#allocation4], 1
    %1888 = vsyncpa %s1887, 1
    %1889 = vsyncpa [#allocation7], 1
    %s1890 = scalar_lea.sflag [#allocation7], 1
    %1891 = vsyncpa %s1890, 1
    %1892 = vsyncpa [#allocation10], 1
    %s1893 = scalar_lea.sflag [#allocation10], 1
    %1894 = vsyncpa %s1893, 1
    %1895 = vsyncpa [#allocation13], 1
    %1896 = vsyncpa [#allocation16], 1
    %1897 = vsyncpa [#allocation19], 1
    %1898 = vsyncpa [#allocation5], 1
    %s1899 = scalar_lea.sflag [#allocation5], 1
    %1900 = vsyncpa %s1899, 1
    %1901 = vsyncpa [#allocation22], 1
    %s1902 = scalar_lea.sflag [#allocation22], 1
    %1903 = vsyncpa %s1902, 1

</llo_original>
